<compile_context>
chip_gen: v5e
topology: v5e:2x2
jax: 0.10.0
libtpu: 0.0.40
codegen_flags: <defaults>
</compile_context>

<pallas_src>
import functools

import jax
import jax.numpy as jnp
from jax.experimental import pallas as pl
from jax.experimental.pallas import tpu as pltpu

LN_EPS = 1e-5   # PyTorch nn.LayerNorm default
LANE = 128
SUBLANE = 8


def _round_up(n, m):
    return ((n + m - 1) // m) * m


# ---------------------------------------------------------------------------
# Fused kernel (whole forward pass)
# ---------------------------------------------------------------------------
def _make_fused_kernel(hidden_dim, output_dim, h_pad, out_pad, num_blocks):
    inv_h = 1.0 / float(hidden_dim)
    unroll = True if num_blocks <= 8 else 2

    def kernel(x_ref, in_w_ref, in_b_ref, in_g_ref, in_be_ref,
               w1s_ref, b1s_ref, g1s_ref, be1s_ref,
               w2s_ref, b2s_ref, g2s_ref, be2s_ref,
               pw1_ref, pb1_ref, pw2_ref, pb2_ref, o_ref):
        # Lane-validity mask for the padded output dim (hoisted, built once).
        out_valid = jax.lax.broadcasted_iota(jnp.int32, (1, out_pad), 1) < output_dim

        def mm(a, w):
            # bf16 x bf16 -> f32 accumulation on the MXU.
            return jnp.dot(a.astype(jnp.bfloat16), w,
                           preferred_element_type=jnp.float32)

        def ln(y, gamma, beta):
            # Single-pass LayerNorm over the real hidden_dim lanes.  Padded lanes of y are
            # exactly 0 (zero-padded weights/bias) so they add nothing to either sum, and
            # zero-padded gamma/beta keep the padded output lanes at 0.
            s = jnp.sum(y, axis=-1, keepdims=True)
            s2 = jnp.sum(y * y, axis=-1, keepdims=True)
            mean = s * inv_h
            var = s2 * inv_h - mean * mean
            return (y - mean) * jax.lax.rsqrt(var + LN_EPS) * gamma + beta

        # ---- input layer: Linear -> LayerNorm -> ReLU --------------------------------
        h = mm(x_ref[...], in_w_ref[...]) + in_b_ref[...]
        h = jnp.maximum(ln(h, in_g_ref[...], in_be_ref[...]), 0.0)

        # ---- residual blocks (stacked weights, in-VMEM loop) --------------------------
        def block_body(k, h):
            t = mm(h, w1s_ref[k]) + b1s_ref[k]
            t = jnp.maximum(ln(t, g1s_ref[k], be1s_ref[k]), 0.0)
            t = mm(t, w2s_ref[k]) + b2s_ref[k]
            t = ln(t, g2s_ref[k], be2s_ref[k]) + h            # residual add
            return jnp.maximum(t, 0.0)

        h = jax.lax.fori_loop(0, num_blocks, block_body, h, unroll=unroll)

        # ---- policy head: Linear -> ReLU -> Linear -> Softmax -------------------------
        t = jnp.maximum(mm(h, pw1_ref[...]) + pb1_ref[...], 0.0)
        logits = mm(t, pw2_ref[...]) + pb2_ref[...]
        logits = jnp.where(out_valid, logits, jnp.float32(-1e30))   # mask padded lanes
        m = jnp.max(logits, axis=-1, keepdims=True)
        e = jnp.exp(logits - m)
        denom = jnp.sum(e, axis=-1, keepdims=True)
        o_ref[...] = e / denom                                      # exact normalization

    return kernel


# ---------------------------------------------------------------------------
# Parameter construction (real dims initialized PyTorch-style, zero-padded to lane-dense)
# ---------------------------------------------------------------------------
def init_params(key, input_dim, hidden_dim, output_dim, num_blocks):
    in_p = _round_up(input_dim, LANE)
    h_p = _round_up(hidden_dim, LANE)
    hh_p = _round_up(hidden_dim // 2, LANE)
    out_p = _round_up(output_dim, LANE)

    keys = jax.random.split(key, 3 + 2 * num_blocks)

    def linear(k, d_in, d_out, p_in, p_out):
        kw, kb = jax.random.split(k)
        bound = 1.0 / (d_in ** 0.5)
        w = jax.random.uniform(kw, (d_in, d_out), jnp.float32, -bound, bound)
        b = jax.random.uniform(kb, (d_out,), jnp.float32, -bound, bound)
        w_p = jnp.zeros((p_in, p_out), jnp.float32).at[:d_in, :d_out].set(w)
        b_p = jnp.zeros((1, p_out), jnp.float32).at[0, :d_out].set(b)
        return w_p.astype(jnp.bfloat16), b_p          # weights bf16, bias f32

    def ln_params(dim, p):
        g = jnp.zeros((1, p), jnp.float32).at[0, :dim].set(1.0)
        be = jnp.zeros((1, p), jnp.float32)
        return g, be

    params = {}
    params["in_w"], params["in_b"] = linear(keys[0], input_dim, hidden_dim, in_p, h_p)
    params["in_g"], params["in_be"] = ln_params(hidden_dim, h_p)

    w1s, b1s, g1s, be1s, w2s, b2s, g2s, be2s = ([] for _ in range(8))
    for i in range(num_blocks):
        w1, b1 = linear(keys[1 + 2 * i], hidden_dim, hidden_dim, h_p, h_p)
        g1, be1 = ln_params(hidden_dim, h_p)
        w2, b2 = linear(keys[2 + 2 * i], hidden_dim, hidden_dim, h_p, h_p)
        g2, be2 = ln_params(hidden_dim, h_p)
        w1s.append(w1); b1s.append(b1); g1s.append(g1); be1s.append(be1)
        w2s.append(w2); b2s.append(b2); g2s.append(g2); be2s.append(be2)

    params["w1s"] = jnp.stack(w1s);  params["b1s"] = jnp.stack(b1s)
    params["g1s"] = jnp.stack(g1s);  params["be1s"] = jnp.stack(be1s)
    params["w2s"] = jnp.stack(w2s);  params["b2s"] = jnp.stack(b2s)
    params["g2s"] = jnp.stack(g2s);  params["be2s"] = jnp.stack(be2s)

    params["ph_w1"], params["ph_b1"] = linear(keys[-2], hidden_dim, hidden_dim // 2, h_p, hh_p)
    params["ph_w2"], params["ph_b2"] = linear(keys[-1], hidden_dim // 2, output_dim, hh_p, out_p)
    return params


# ---------------------------------------------------------------------------
# Forward pass (single fused pallas_call, jit-compiled)
# ---------------------------------------------------------------------------
@functools.partial(jax.jit,
                   static_argnames=("input_dim", "hidden_dim", "output_dim", "num_blocks"))
def linear_resnet_forward(params, x, *, input_dim, hidden_dim, output_dim, num_blocks):
    batch = x.shape[0]
    in_p = _round_up(input_dim, LANE)
    h_p = _round_up(hidden_dim, LANE)
    hh_p = _round_up(hidden_dim // 2, LANE)
    out_p = _round_up(output_dim, LANE)

    # Batch tiling: big tiles amortize per-step overhead and MXU weight pushes; when the batch
    # is large enough, keep >= 2 grid steps so "parallel" can shard across v7x's 2 TensorCores.
    b_p0 = _round_up(batch, SUBLANE)
    if b_p0 > 1024:
        tb = 512
    elif b_p0 >= 2 * SUBLANE:
        tb = _round_up(pl.cdiv(b_p0, 2), SUBLANE)     # exactly 2 grid steps
    else:
        tb = b_p0                                     # tiny batch: 1 step
    b_p = _round_up(b_p0, tb)
    grid = (b_p // tb,)

    # Pad x (jnp.pad fuses; padded input lanes hit zero weight rows, so values don't matter).
    x_p = jnp.pad(x, ((0, b_p - batch), (0, in_p - input_dim)))

    args = (x_p,
            params["in_w"], params["in_b"], params["in_g"], params["in_be"],
            params["w1s"], params["b1s"], params["g1s"], params["be1s"],
            params["w2s"], params["b2s"], params["g2s"], params["be2s"],
            params["ph_w1"], params["ph_b1"], params["ph_w2"], params["ph_b2"])

    # Grid-invariant operands: single-buffered (they never change across grid steps).
    def resident2d(shape):
        return pl.BlockSpec(shape, lambda i: (0, 0), pipeline_mode=pl.Buffered(1))

    def resident3d(shape):
        return pl.BlockSpec(shape, lambda i: (0, 0, 0), pipeline_mode=pl.Buffered(1))

    in_specs = [
        pl.BlockSpec((tb, in_p), lambda i: (i, 0)),                 # x (batch-tiled, dbl-buffered)
        resident2d((in_p, h_p)),                                    # in_w
        resident2d((1, h_p)), resident2d((1, h_p)), resident2d((1, h_p)),
        resident3d((num_blocks, h_p, h_p)),                         # w1s
        resident3d((num_blocks, 1, h_p)),                           # b1s
        resident3d((num_blocks, 1, h_p)),                           # g1s
        resident3d((num_blocks, 1, h_p)),                           # be1s
        resident3d((num_blocks, h_p, h_p)),                         # w2s
        resident3d((num_blocks, 1, h_p)),                           # b2s
        resident3d((num_blocks, 1, h_p)),                           # g2s
        resident3d((num_blocks, 1, h_p)),                           # be2s
        resident2d((h_p, hh_p)),                                    # ph_w1
        resident2d((1, hh_p)),                                      # ph_b1
        resident2d((hh_p, out_p)),                                  # ph_w2
        resident2d((1, out_p)),                                     # ph_b2
    ]
    out_specs = pl.BlockSpec((tb, out_p), lambda i: (i, 0))

    # VMEM budget: resident weights (single-buffered) + double-buffered x/out tiles +
    # a few f32 activation temporaries, with headroom.  Clamp to a per-generation ceiling
    # (128 MiB physical on v5e/v6e, 64 MiB on v7x) minus compiler-scratch headroom.
    resident_bytes = sum(int(a.size) * a.dtype.itemsize for a in args[1:])
    io_bytes = 2 * (tb * in_p + tb * out_p) * 4
    act_bytes = 6 * tb * max(h_p, hh_p, out_p) * 4
    needed = resident_bytes + io_bytes + act_bytes + (4 << 20)
    try:
        phys = int(pltpu.get_tpu_info().vmem_capacity_bytes)
    except Exception:                                   # conservative fallback (v7x-safe)
        phys = 64 << 20
    ceiling = max(phys - (12 << 20), 32 << 20)
    vmem_limit = int(min(max(needed, 32 << 20), ceiling))

    # MXU note: with h_p == 128 each matmul fills only 128 of the 256-wide v6e/v7x MXU; this
    # kernel is VPU/XLU/latency-bound at small hidden dims, so the wins are LN/tiling, not MXU.
    kernel = _make_fused_kernel(hidden_dim, output_dim, h_p, out_p, num_blocks)

    out = pl.pallas_call(
        kernel,
        out_shape=jax.ShapeDtypeStruct((b_p, out_p), jnp.float32),
        grid=grid,
        in_specs=in_specs,
        out_specs=out_specs,
        compiler_params=pltpu.CompilerParams(
            dimension_semantics=("parallel",),
            vmem_limit_bytes=vmem_limit),
    )(*args)

    return out[:batch, :output_dim]


# ---------------------------------------------------------------------------
# Pure-JAX reference on the real (unpadded) dims, matching the bf16-matmul numerics
# ---------------------------------------------------------------------------
def _ref_forward(params, x, input_dim, hidden_dim, output_dim, num_blocks):
    H, HH, O = hidden_dim, hidden_dim // 2, output_dim

    def ln(y, g, b):
        mu = jnp.mean(y, -1, keepdims=True)
        var = jnp.mean((y - mu) ** 2, -1, keepdims=True)
        return (y - mu) / jnp.sqrt(var + LN_EPS) * g + b

    def mm(a, w):
        return jnp.dot(a.astype(jnp.bfloat16), w, preferred_element_type=jnp.float32)

    relu = lambda v: jnp.maximum(v, 0.0)

    h = relu(ln(mm(x, params["in_w"][:input_dim, :H]) + params["in_b"][:, :H],
                params["in_g"][:, :H], params["in_be"][:, :H]))
    for k in range(num_blocks):
        t = relu(ln(mm(h, params["w1s"][k, :H, :H]) + params["b1s"][k, :, :H],
                    params["g1s"][k, :, :H], params["be1s"][k, :, :H]))
        t = ln(mm(t, params["w2s"][k, :H, :H]) + params["b2s"][k, :, :H],
               params["g2s"][k, :, :H], params["be2s"][k, :, :H]) + h
        h = relu(t)
    t = relu(mm(h, params["ph_w1"][:H, :HH]) + params["ph_b1"][:, :HH])
    logits = mm(t, params["ph_w2"][:HH, :O]) + params["ph_b2"][:, :O]
    return jax.nn.softmax(logits, axis=-1)


# ---------------------------------------------------------------------------
if __name__ == "__main__":
    input_dim, hidden_dim, output_dim, num_blocks = 16, 32, 8, 2
    batch = 4

    key = jax.random.PRNGKey(0)
    k_params, k_x = jax.random.split(key)
    params = init_params(k_params, input_dim, hidden_dim, output_dim, num_blocks)
    x = jax.random.normal(k_x, (batch, input_dim), jnp.float32)

    policy = linear_resnet_forward(params, x,
                                   input_dim=input_dim, hidden_dim=hidden_dim,
                                   output_dim=output_dim, num_blocks=num_blocks)
    policy = jax.block_until_ready(policy)

    ref = _ref_forward(params, x, input_dim, hidden_dim, output_dim, num_blocks)
    assert policy.shape == (batch, output_dim)
    assert jnp.allclose(jnp.sum(policy, axis=-1), 1.0, atol=1e-4)
    assert jnp.allclose(policy, ref, atol=2e-3, rtol=2e-3)

    print("KERNEL_OK")
</pallas_src>

<mosaic_0001>
module attributes {stable_mosaic.version = 11 : i64} {
  func.func @kernel(%arg0: i32, %arg1: memref<8x128xf32, #tpu.memory_space<vmem>>, %arg2: memref<128x128xbf16, #tpu.memory_space<vmem>>, %arg3: memref<1x128xf32, #tpu.memory_space<vmem>>, %arg4: memref<1x128xf32, #tpu.memory_space<vmem>>, %arg5: memref<1x128xf32, #tpu.memory_space<vmem>>, %arg6: memref<2x128x128xbf16, #tpu.memory_space<vmem>>, %arg7: memref<2x1x128xf32, #tpu.memory_space<vmem>>, %arg8: memref<2x1x128xf32, #tpu.memory_space<vmem>>, %arg9: memref<2x1x128xf32, #tpu.memory_space<vmem>>, %arg10: memref<2x128x128xbf16, #tpu.memory_space<vmem>>, %arg11: memref<2x1x128xf32, #tpu.memory_space<vmem>>, %arg12: memref<2x1x128xf32, #tpu.memory_space<vmem>>, %arg13: memref<2x1x128xf32, #tpu.memory_space<vmem>>, %arg14: memref<128x128xbf16, #tpu.memory_space<vmem>>, %arg15: memref<1x128xf32, #tpu.memory_space<vmem>>, %arg16: memref<128x128xbf16, #tpu.memory_space<vmem>>, %arg17: memref<1x128xf32, #tpu.memory_space<vmem>>, %arg18: memref<8x128xf32, #tpu.memory_space<vmem>>) attributes {dimension_semantics = [#tpu.dimension_semantics<parallel>], iteration_bounds = array<i64: 1>, scalar_prefetch = 0 : i64, scratch_operands = 0 : i64, tpu.core_type = #tpu.core_type<tc>, window_params = [{transform_indices = @transform_0, window_bounds = array<i64: 8, 128>}, {pipeline_mode = #tpu.pipeline_mode<synchronous>, transform_indices = @transform_1, window_bounds = array<i64: 128, 128>}, {pipeline_mode = #tpu.pipeline_mode<synchronous>, transform_indices = @transform_2, window_bounds = array<i64: 1, 128>}, {pipeline_mode = #tpu.pipeline_mode<synchronous>, transform_indices = @transform_3, window_bounds = array<i64: 1, 128>}, {pipeline_mode = #tpu.pipeline_mode<synchronous>, transform_indices = @transform_4, window_bounds = array<i64: 1, 128>}, {pipeline_mode = #tpu.pipeline_mode<synchronous>, transform_indices = @transform_5, window_bounds = array<i64: 2, 128, 128>}, {pipeline_mode = #tpu.pipeline_mode<synchronous>, transform_indices = @transform_6, window_bounds = array<i64: 2, 1, 128>}, {pipeline_mode = #tpu.pipeline_mode<synchronous>, transform_indices = @transform_7, window_bounds = array<i64: 2, 1, 128>}, {pipeline_mode = #tpu.pipeline_mode<synchronous>, transform_indices = @transform_8, window_bounds = array<i64: 2, 1, 128>}, {pipeline_mode = #tpu.pipeline_mode<synchronous>, transform_indices = @transform_9, window_bounds = array<i64: 2, 128, 128>}, {pipeline_mode = #tpu.pipeline_mode<synchronous>, transform_indices = @transform_10, window_bounds = array<i64: 2, 1, 128>}, {pipeline_mode = #tpu.pipeline_mode<synchronous>, transform_indices = @transform_11, window_bounds = array<i64: 2, 1, 128>}, {pipeline_mode = #tpu.pipeline_mode<synchronous>, transform_indices = @transform_12, window_bounds = array<i64: 2, 1, 128>}, {pipeline_mode = #tpu.pipeline_mode<synchronous>, transform_indices = @transform_13, window_bounds = array<i64: 128, 128>}, {pipeline_mode = #tpu.pipeline_mode<synchronous>, transform_indices = @transform_14, window_bounds = array<i64: 1, 128>}, {pipeline_mode = #tpu.pipeline_mode<synchronous>, transform_indices = @transform_15, window_bounds = array<i64: 128, 128>}, {pipeline_mode = #tpu.pipeline_mode<synchronous>, transform_indices = @transform_16, window_bounds = array<i64: 1, 128>}, {transform_indices = @transform_17, window_bounds = array<i64: 8, 128>}]} {
    %0 = tpu.iota {dimensions = array<i32: 1>} : vector<1x128xi32>
    %c8_i32 = arith.constant 8 : i32
    %1 = vector.broadcast %c8_i32 : i32 to vector<1x128xi32>
    %2 = arith.cmpi slt, %0, %1 : vector<1x128xi32>
    %c0 = arith.constant 0 : index
    %c0_0 = arith.constant 0 : index
    %3 = vector.load %arg1[%c0, %c0_0] : memref<8x128xf32, #tpu.memory_space<vmem>>, vector<8x128xf32>
    %c0_1 = arith.constant 0 : index
    %c0_2 = arith.constant 0 : index
    %4 = vector.load %arg2[%c0_1, %c0_2] : memref<128x128xbf16, #tpu.memory_space<vmem>>, vector<128x128xbf16>
    %5 = arith.truncf %3 : vector<8x128xf32> to vector<8x128xbf16>
    %cst = arith.constant dense<0.000000e+00> : vector<8x128xf32>
    %6 = tpu.matmul %5, %4, %cst {dimension_numbers = #tpu.dot_dimension_numbers<[1], [0], [0], [1], [0, 0, 1, 1], [], []>} : vector<8x128xbf16>, vector<128x128xbf16>, vector<8x128xf32> -> vector<8x128xf32>
    %c0_3 = arith.constant 0 : index
    %c0_4 = arith.constant 0 : index
    %7 = vector.load %arg3[%c0_3, %c0_4] : memref<1x128xf32, #tpu.memory_space<vmem>>, vector<1x128xf32>
    %8 = vector.broadcast %7 : vector<1x128xf32> to vector<8x128xf32>
    %9 = arith.addf %6, %8 : vector<8x128xf32>
    %c0_5 = arith.constant 0 : index
    %c0_6 = arith.constant 0 : index
    %10 = vector.load %arg4[%c0_5, %c0_6] : memref<1x128xf32, #tpu.memory_space<vmem>>, vector<1x128xf32>
    %c0_7 = arith.constant 0 : index
    %c0_8 = arith.constant 0 : index
    %11 = vector.load %arg5[%c0_7, %c0_8] : memref<1x128xf32, #tpu.memory_space<vmem>>, vector<1x128xf32>
    %cst_9 = arith.constant dense<0.000000e+00> : vector<8xf32>
    %12 = vector.multi_reduction <add>, %9, %cst_9 [1] : vector<8x128xf32> to vector<8xf32>
    %13 = vector.shape_cast %12 : vector<8xf32> to vector<8x1xf32>
    %14 = arith.mulf %9, %9 : vector<8x128xf32>
    %cst_10 = arith.constant dense<0.000000e+00> : vector<8xf32>
    %15 = vector.multi_reduction <add>, %14, %cst_10 [1] : vector<8x128xf32> to vector<8xf32>
    %16 = vector.shape_cast %15 : vector<8xf32> to vector<8x1xf32>
    %cst_11 = arith.constant 3.125000e-02 : f32
    %17 = vector.broadcast %cst_11 : f32 to vector<8x1xf32>
    %18 = arith.mulf %13, %17 : vector<8x1xf32>
    %cst_12 = arith.constant 3.125000e-02 : f32
    %19 = vector.broadcast %cst_12 : f32 to vector<8x1xf32>
    %20 = arith.mulf %16, %19 : vector<8x1xf32>
    %21 = arith.mulf %18, %18 : vector<8x1xf32>
    %22 = arith.subf %20, %21 : vector<8x1xf32>
    %23 = vector.broadcast %18 : vector<8x1xf32> to vector<8x128xf32>
    %24 = arith.subf %9, %23 : vector<8x128xf32>
    %cst_13 = arith.constant 9.99999974E-6 : f32
    %25 = vector.broadcast %cst_13 : f32 to vector<8x1xf32>
    %26 = arith.addf %22, %25 : vector<8x1xf32>
    %27 = math.rsqrt %26 : vector<8x1xf32>
    %28 = vector.broadcast %27 : vector<8x1xf32> to vector<8x128xf32>
    %29 = arith.mulf %24, %28 : vector<8x128xf32>
    %30 = vector.broadcast %10 : vector<1x128xf32> to vector<8x128xf32>
    %31 = arith.mulf %29, %30 : vector<8x128xf32>
    %32 = vector.broadcast %11 : vector<1x128xf32> to vector<8x128xf32>
    %33 = arith.addf %31, %32 : vector<8x128xf32>
    %cst_14 = arith.constant 0.000000e+00 : f32
    %34 = vector.broadcast %cst_14 : f32 to vector<8x128xf32>
    %35 = arith.maximumf %33, %34 : vector<8x128xf32>
    %c0_i32 = arith.constant 0 : i32
    %36 = arith.index_cast %c0_i32 : i32 to index
    %c0_15 = arith.constant 0 : index
    %c0_16 = arith.constant 0 : index
    %37 = vector.load %arg6[%36, %c0_15, %c0_16] : memref<2x128x128xbf16, #tpu.memory_space<vmem>>, vector<1x128x128xbf16>
    %38 = vector.shape_cast %37 : vector<1x128x128xbf16> to vector<128x128xbf16>
    %39 = arith.truncf %35 : vector<8x128xf32> to vector<8x128xbf16>
    %cst_17 = arith.constant dense<0.000000e+00> : vector<8x128xf32>
    %40 = tpu.matmul %39, %38, %cst_17 {dimension_numbers = #tpu.dot_dimension_numbers<[1], [0], [0], [1], [0, 0, 1, 1], [], []>} : vector<8x128xbf16>, vector<128x128xbf16>, vector<8x128xf32> -> vector<8x128xf32>
    %41 = arith.index_cast %c0_i32 : i32 to index
    %c0_18 = arith.constant 0 : index
    %c0_19 = arith.constant 0 : index
    %42 = vector.load %arg7[%41, %c0_18, %c0_19] : memref<2x1x128xf32, #tpu.memory_space<vmem>>, vector<1x1x128xf32>
    %43 = vector.shape_cast %42 : vector<1x1x128xf32> to vector<1x128xf32>
    %44 = vector.broadcast %43 : vector<1x128xf32> to vector<8x128xf32>
    %45 = arith.addf %40, %44 : vector<8x128xf32>
    %46 = arith.index_cast %c0_i32 : i32 to index
    %c0_20 = arith.constant 0 : index
    %c0_21 = arith.constant 0 : index
    %47 = vector.load %arg8[%46, %c0_20, %c0_21] : memref<2x1x128xf32, #tpu.memory_space<vmem>>, vector<1x1x128xf32>
    %48 = vector.shape_cast %47 : vector<1x1x128xf32> to vector<1x128xf32>
    %49 = arith.index_cast %c0_i32 : i32 to index
    %c0_22 = arith.constant 0 : index
    %c0_23 = arith.constant 0 : index
    %50 = vector.load %arg9[%49, %c0_22, %c0_23] : memref<2x1x128xf32, #tpu.memory_space<vmem>>, vector<1x1x128xf32>
    %51 = vector.shape_cast %50 : vector<1x1x128xf32> to vector<1x128xf32>
    %cst_24 = arith.constant dense<0.000000e+00> : vector<8xf32>
    %52 = vector.multi_reduction <add>, %45, %cst_24 [1] : vector<8x128xf32> to vector<8xf32>
    %53 = vector.shape_cast %52 : vector<8xf32> to vector<8x1xf32>
    %54 = arith.mulf %45, %45 : vector<8x128xf32>
    %cst_25 = arith.constant dense<0.000000e+00> : vector<8xf32>
    %55 = vector.multi_reduction <add>, %54, %cst_25 [1] : vector<8x128xf32> to vector<8xf32>
    %56 = vector.shape_cast %55 : vector<8xf32> to vector<8x1xf32>
    %cst_26 = arith.constant 3.125000e-02 : f32
    %57 = vector.broadcast %cst_26 : f32 to vector<8x1xf32>
    %58 = arith.mulf %53, %57 : vector<8x1xf32>
    %cst_27 = arith.constant 3.125000e-02 : f32
    %59 = vector.broadcast %cst_27 : f32 to vector<8x1xf32>
    %60 = arith.mulf %56, %59 : vector<8x1xf32>
    %61 = arith.mulf %58, %58 : vector<8x1xf32>
    %62 = arith.subf %60, %61 : vector<8x1xf32>
    %63 = vector.broadcast %58 : vector<8x1xf32> to vector<8x128xf32>
    %64 = arith.subf %45, %63 : vector<8x128xf32>
    %cst_28 = arith.constant 9.99999974E-6 : f32
    %65 = vector.broadcast %cst_28 : f32 to vector<8x1xf32>
    %66 = arith.addf %62, %65 : vector<8x1xf32>
    %67 = math.rsqrt %66 : vector<8x1xf32>
    %68 = vector.broadcast %67 : vector<8x1xf32> to vector<8x128xf32>
    %69 = arith.mulf %64, %68 : vector<8x128xf32>
    %70 = vector.broadcast %48 : vector<1x128xf32> to vector<8x128xf32>
    %71 = arith.mulf %69, %70 : vector<8x128xf32>
    %72 = vector.broadcast %51 : vector<1x128xf32> to vector<8x128xf32>
    %73 = arith.addf %71, %72 : vector<8x128xf32>
    %cst_29 = arith.constant 0.000000e+00 : f32
    %74 = vector.broadcast %cst_29 : f32 to vector<8x128xf32>
    %75 = arith.maximumf %73, %74 : vector<8x128xf32>
    %76 = arith.index_cast %c0_i32 : i32 to index
    %c0_30 = arith.constant 0 : index
    %c0_31 = arith.constant 0 : index
    %77 = vector.load %arg10[%76, %c0_30, %c0_31] : memref<2x128x128xbf16, #tpu.memory_space<vmem>>, vector<1x128x128xbf16>
    %78 = vector.shape_cast %77 : vector<1x128x128xbf16> to vector<128x128xbf16>
    %79 = arith.truncf %75 : vector<8x128xf32> to vector<8x128xbf16>
    %cst_32 = arith.constant dense<0.000000e+00> : vector<8x128xf32>
    %80 = tpu.matmul %79, %78, %cst_32 {dimension_numbers = #tpu.dot_dimension_numbers<[1], [0], [0], [1], [0, 0, 1, 1], [], []>} : vector<8x128xbf16>, vector<128x128xbf16>, vector<8x128xf32> -> vector<8x128xf32>
    %81 = arith.index_cast %c0_i32 : i32 to index
    %c0_33 = arith.constant 0 : index
    %c0_34 = arith.constant 0 : index
    %82 = vector.load %arg11[%81, %c0_33, %c0_34] : memref<2x1x128xf32, #tpu.memory_space<vmem>>, vector<1x1x128xf32>
    %83 = vector.shape_cast %82 : vector<1x1x128xf32> to vector<1x128xf32>
    %84 = vector.broadcast %83 : vector<1x128xf32> to vector<8x128xf32>
    %85 = arith.addf %80, %84 : vector<8x128xf32>
    %86 = arith.index_cast %c0_i32 : i32 to index
    %c0_35 = arith.constant 0 : index
    %c0_36 = arith.constant 0 : index
    %87 = vector.load %arg12[%86, %c0_35, %c0_36] : memref<2x1x128xf32, #tpu.memory_space<vmem>>, vector<1x1x128xf32>
    %88 = vector.shape_cast %87 : vector<1x1x128xf32> to vector<1x128xf32>
    %89 = arith.index_cast %c0_i32 : i32 to index
    %c0_37 = arith.constant 0 : index
    %c0_38 = arith.constant 0 : index
    %90 = vector.load %arg13[%89, %c0_37, %c0_38] : memref<2x1x128xf32, #tpu.memory_space<vmem>>, vector<1x1x128xf32>
    %91 = vector.shape_cast %90 : vector<1x1x128xf32> to vector<1x128xf32>
    %cst_39 = arith.constant dense<0.000000e+00> : vector<8xf32>
    %92 = vector.multi_reduction <add>, %85, %cst_39 [1] : vector<8x128xf32> to vector<8xf32>
    %93 = vector.shape_cast %92 : vector<8xf32> to vector<8x1xf32>
    %94 = arith.mulf %85, %85 : vector<8x128xf32>
    %cst_40 = arith.constant dense<0.000000e+00> : vector<8xf32>
    %95 = vector.multi_reduction <add>, %94, %cst_40 [1] : vector<8x128xf32> to vector<8xf32>
    %96 = vector.shape_cast %95 : vector<8xf32> to vector<8x1xf32>
    %cst_41 = arith.constant 3.125000e-02 : f32
    %97 = vector.broadcast %cst_41 : f32 to vector<8x1xf32>
    %98 = arith.mulf %93, %97 : vector<8x1xf32>
    %cst_42 = arith.constant 3.125000e-02 : f32
    %99 = vector.broadcast %cst_42 : f32 to vector<8x1xf32>
    %100 = arith.mulf %96, %99 : vector<8x1xf32>
    %101 = arith.mulf %98, %98 : vector<8x1xf32>
    %102 = arith.subf %100, %101 : vector<8x1xf32>
    %103 = vector.broadcast %98 : vector<8x1xf32> to vector<8x128xf32>
    %104 = arith.subf %85, %103 : vector<8x128xf32>
    %cst_43 = arith.constant 9.99999974E-6 : f32
    %105 = vector.broadcast %cst_43 : f32 to vector<8x1xf32>
    %106 = arith.addf %102, %105 : vector<8x1xf32>
    %107 = math.rsqrt %106 : vector<8x1xf32>
    %108 = vector.broadcast %107 : vector<8x1xf32> to vector<8x128xf32>
    %109 = arith.mulf %104, %108 : vector<8x128xf32>
    %110 = vector.broadcast %88 : vector<1x128xf32> to vector<8x128xf32>
    %111 = arith.mulf %109, %110 : vector<8x128xf32>
    %112 = vector.broadcast %91 : vector<1x128xf32> to vector<8x128xf32>
    %113 = arith.addf %111, %112 : vector<8x128xf32>
    %114 = arith.addf %113, %35 : vector<8x128xf32>
    %cst_44 = arith.constant 0.000000e+00 : f32
    %115 = vector.broadcast %cst_44 : f32 to vector<8x128xf32>
    %116 = arith.maximumf %114, %115 : vector<8x128xf32>
    %c1_i32 = arith.constant 1 : i32
    %117 = arith.index_cast %c1_i32 : i32 to index
    %c0_45 = arith.constant 0 : index
    %c0_46 = arith.constant 0 : index
    %118 = vector.load %arg6[%117, %c0_45, %c0_46] : memref<2x128x128xbf16, #tpu.memory_space<vmem>>, vector<1x128x128xbf16>
    %119 = vector.shape_cast %118 : vector<1x128x128xbf16> to vector<128x128xbf16>
    %120 = arith.truncf %116 : vector<8x128xf32> to vector<8x128xbf16>
    %cst_47 = arith.constant dense<0.000000e+00> : vector<8x128xf32>
    %121 = tpu.matmul %120, %119, %cst_47 {dimension_numbers = #tpu.dot_dimension_numbers<[1], [0], [0], [1], [0, 0, 1, 1], [], []>} : vector<8x128xbf16>, vector<128x128xbf16>, vector<8x128xf32> -> vector<8x128xf32>
    %122 = arith.index_cast %c1_i32 : i32 to index
    %c0_48 = arith.constant 0 : index
    %c0_49 = arith.constant 0 : index
    %123 = vector.load %arg7[%122, %c0_48, %c0_49] : memref<2x1x128xf32, #tpu.memory_space<vmem>>, vector<1x1x128xf32>
    %124 = vector.shape_cast %123 : vector<1x1x128xf32> to vector<1x128xf32>
    %125 = vector.broadcast %124 : vector<1x128xf32> to vector<8x128xf32>
    %126 = arith.addf %121, %125 : vector<8x128xf32>
    %127 = arith.index_cast %c1_i32 : i32 to index
    %c0_50 = arith.constant 0 : index
    %c0_51 = arith.constant 0 : index
    %128 = vector.load %arg8[%127, %c0_50, %c0_51] : memref<2x1x128xf32, #tpu.memory_space<vmem>>, vector<1x1x128xf32>
    %129 = vector.shape_cast %128 : vector<1x1x128xf32> to vector<1x128xf32>
    %130 = arith.index_cast %c1_i32 : i32 to index
    %c0_52 = arith.constant 0 : index
    %c0_53 = arith.constant 0 : index
    %131 = vector.load %arg9[%130, %c0_52, %c0_53] : memref<2x1x128xf32, #tpu.memory_space<vmem>>, vector<1x1x128xf32>
    %132 = vector.shape_cast %131 : vector<1x1x128xf32> to vector<1x128xf32>
    %cst_54 = arith.constant dense<0.000000e+00> : vector<8xf32>
    %133 = vector.multi_reduction <add>, %126, %cst_54 [1] : vector<8x128xf32> to vector<8xf32>
    %134 = vector.shape_cast %133 : vector<8xf32> to vector<8x1xf32>
    %135 = arith.mulf %126, %126 : vector<8x128xf32>
    %cst_55 = arith.constant dense<0.000000e+00> : vector<8xf32>
    %136 = vector.multi_reduction <add>, %135, %cst_55 [1] : vector<8x128xf32> to vector<8xf32>
    %137 = vector.shape_cast %136 : vector<8xf32> to vector<8x1xf32>
    %cst_56 = arith.constant 3.125000e-02 : f32
    %138 = vector.broadcast %cst_56 : f32 to vector<8x1xf32>
    %139 = arith.mulf %134, %138 : vector<8x1xf32>
    %cst_57 = arith.constant 3.125000e-02 : f32
    %140 = vector.broadcast %cst_57 : f32 to vector<8x1xf32>
    %141 = arith.mulf %137, %140 : vector<8x1xf32>
    %142 = arith.mulf %139, %139 : vector<8x1xf32>
    %143 = arith.subf %141, %142 : vector<8x1xf32>
    %144 = vector.broadcast %139 : vector<8x1xf32> to vector<8x128xf32>
    %145 = arith.subf %126, %144 : vector<8x128xf32>
    %cst_58 = arith.constant 9.99999974E-6 : f32
    %146 = vector.broadcast %cst_58 : f32 to vector<8x1xf32>
    %147 = arith.addf %143, %146 : vector<8x1xf32>
    %148 = math.rsqrt %147 : vector<8x1xf32>
    %149 = vector.broadcast %148 : vector<8x1xf32> to vector<8x128xf32>
    %150 = arith.mulf %145, %149 : vector<8x128xf32>
    %151 = vector.broadcast %129 : vector<1x128xf32> to vector<8x128xf32>
    %152 = arith.mulf %150, %151 : vector<8x128xf32>
    %153 = vector.broadcast %132 : vector<1x128xf32> to vector<8x128xf32>
    %154 = arith.addf %152, %153 : vector<8x128xf32>
    %cst_59 = arith.constant 0.000000e+00 : f32
    %155 = vector.broadcast %cst_59 : f32 to vector<8x128xf32>
    %156 = arith.maximumf %154, %155 : vector<8x128xf32>
    %157 = arith.index_cast %c1_i32 : i32 to index
    %c0_60 = arith.constant 0 : index
    %c0_61 = arith.constant 0 : index
    %158 = vector.load %arg10[%157, %c0_60, %c0_61] : memref<2x128x128xbf16, #tpu.memory_space<vmem>>, vector<1x128x128xbf16>
    %159 = vector.shape_cast %158 : vector<1x128x128xbf16> to vector<128x128xbf16>
    %160 = arith.truncf %156 : vector<8x128xf32> to vector<8x128xbf16>
    %cst_62 = arith.constant dense<0.000000e+00> : vector<8x128xf32>
    %161 = tpu.matmul %160, %159, %cst_62 {dimension_numbers = #tpu.dot_dimension_numbers<[1], [0], [0], [1], [0, 0, 1, 1], [], []>} : vector<8x128xbf16>, vector<128x128xbf16>, vector<8x128xf32> -> vector<8x128xf32>
    %162 = arith.index_cast %c1_i32 : i32 to index
    %c0_63 = arith.constant 0 : index
    %c0_64 = arith.constant 0 : index
    %163 = vector.load %arg11[%162, %c0_63, %c0_64] : memref<2x1x128xf32, #tpu.memory_space<vmem>>, vector<1x1x128xf32>
    %164 = vector.shape_cast %163 : vector<1x1x128xf32> to vector<1x128xf32>
    %165 = vector.broadcast %164 : vector<1x128xf32> to vector<8x128xf32>
    %166 = arith.addf %161, %165 : vector<8x128xf32>
    %167 = arith.index_cast %c1_i32 : i32 to index
    %c0_65 = arith.constant 0 : index
    %c0_66 = arith.constant 0 : index
    %168 = vector.load %arg12[%167, %c0_65, %c0_66] : memref<2x1x128xf32, #tpu.memory_space<vmem>>, vector<1x1x128xf32>
    %169 = vector.shape_cast %168 : vector<1x1x128xf32> to vector<1x128xf32>
    %170 = arith.index_cast %c1_i32 : i32 to index
    %c0_67 = arith.constant 0 : index
    %c0_68 = arith.constant 0 : index
    %171 = vector.load %arg13[%170, %c0_67, %c0_68] : memref<2x1x128xf32, #tpu.memory_space<vmem>>, vector<1x1x128xf32>
    %172 = vector.shape_cast %171 : vector<1x1x128xf32> to vector<1x128xf32>
    %cst_69 = arith.constant dense<0.000000e+00> : vector<8xf32>
    %173 = vector.multi_reduction <add>, %166, %cst_69 [1] : vector<8x128xf32> to vector<8xf32>
    %174 = vector.shape_cast %173 : vector<8xf32> to vector<8x1xf32>
    %175 = arith.mulf %166, %166 : vector<8x128xf32>
    %cst_70 = arith.constant dense<0.000000e+00> : vector<8xf32>
    %176 = vector.multi_reduction <add>, %175, %cst_70 [1] : vector<8x128xf32> to vector<8xf32>
    %177 = vector.shape_cast %176 : vector<8xf32> to vector<8x1xf32>
    %cst_71 = arith.constant 3.125000e-02 : f32
    %178 = vector.broadcast %cst_71 : f32 to vector<8x1xf32>
    %179 = arith.mulf %174, %178 : vector<8x1xf32>
    %cst_72 = arith.constant 3.125000e-02 : f32
    %180 = vector.broadcast %cst_72 : f32 to vector<8x1xf32>
    %181 = arith.mulf %177, %180 : vector<8x1xf32>
    %182 = arith.mulf %179, %179 : vector<8x1xf32>
    %183 = arith.subf %181, %182 : vector<8x1xf32>
    %184 = vector.broadcast %179 : vector<8x1xf32> to vector<8x128xf32>
    %185 = arith.subf %166, %184 : vector<8x128xf32>
    %cst_73 = arith.constant 9.99999974E-6 : f32
    %186 = vector.broadcast %cst_73 : f32 to vector<8x1xf32>
    %187 = arith.addf %183, %186 : vector<8x1xf32>
    %188 = math.rsqrt %187 : vector<8x1xf32>
    %189 = vector.broadcast %188 : vector<8x1xf32> to vector<8x128xf32>
    %190 = arith.mulf %185, %189 : vector<8x128xf32>
    %191 = vector.broadcast %169 : vector<1x128xf32> to vector<8x128xf32>
    %192 = arith.mulf %190, %191 : vector<8x128xf32>
    %193 = vector.broadcast %172 : vector<1x128xf32> to vector<8x128xf32>
    %194 = arith.addf %192, %193 : vector<8x128xf32>
    %195 = arith.addf %194, %116 : vector<8x128xf32>
    %cst_74 = arith.constant 0.000000e+00 : f32
    %196 = vector.broadcast %cst_74 : f32 to vector<8x128xf32>
    %197 = arith.maximumf %195, %196 : vector<8x128xf32>
    %c2_i32 = arith.constant 2 : i32
    %c0_75 = arith.constant 0 : index
    %c0_76 = arith.constant 0 : index
    %198 = vector.load %arg14[%c0_75, %c0_76] : memref<128x128xbf16, #tpu.memory_space<vmem>>, vector<128x128xbf16>
    %199 = arith.truncf %197 : vector<8x128xf32> to vector<8x128xbf16>
    %cst_77 = arith.constant dense<0.000000e+00> : vector<8x128xf32>
    %200 = tpu.matmul %199, %198, %cst_77 {dimension_numbers = #tpu.dot_dimension_numbers<[1], [0], [0], [1], [0, 0, 1, 1], [], []>} : vector<8x128xbf16>, vector<128x128xbf16>, vector<8x128xf32> -> vector<8x128xf32>
    %c0_78 = arith.constant 0 : index
    %c0_79 = arith.constant 0 : index
    %201 = vector.load %arg15[%c0_78, %c0_79] : memref<1x128xf32, #tpu.memory_space<vmem>>, vector<1x128xf32>
    %202 = vector.broadcast %201 : vector<1x128xf32> to vector<8x128xf32>
    %203 = arith.addf %200, %202 : vector<8x128xf32>
    %cst_80 = arith.constant 0.000000e+00 : f32
    %204 = vector.broadcast %cst_80 : f32 to vector<8x128xf32>
    %205 = arith.maximumf %203, %204 : vector<8x128xf32>
    %c0_81 = arith.constant 0 : index
    %c0_82 = arith.constant 0 : index
    %206 = vector.load %arg16[%c0_81, %c0_82] : memref<128x128xbf16, #tpu.memory_space<vmem>>, vector<128x128xbf16>
    %207 = arith.truncf %205 : vector<8x128xf32> to vector<8x128xbf16>
    %cst_83 = arith.constant dense<0.000000e+00> : vector<8x128xf32>
    %208 = tpu.matmul %207, %206, %cst_83 {dimension_numbers = #tpu.dot_dimension_numbers<[1], [0], [0], [1], [0, 0, 1, 1], [], []>} : vector<8x128xbf16>, vector<128x128xbf16>, vector<8x128xf32> -> vector<8x128xf32>
    %c0_84 = arith.constant 0 : index
    %c0_85 = arith.constant 0 : index
    %209 = vector.load %arg17[%c0_84, %c0_85] : memref<1x128xf32, #tpu.memory_space<vmem>>, vector<1x128xf32>
    %210 = vector.broadcast %209 : vector<1x128xf32> to vector<8x128xf32>
    %211 = arith.addf %208, %210 : vector<8x128xf32>
    %cst_86 = arith.constant -1.000000e+30 : f32
    %212 = vector.shape_cast %2 : vector<1x128xi1> to vector<1x128xi1>
    %213 = vector.broadcast %212 : vector<1x128xi1> to vector<8x128xi1>
    %214 = vector.broadcast %cst_86 : f32 to vector<8x128xf32>
    %215 = arith.select %213, %211, %214 : vector<8x128xi1>, vector<8x128xf32>
    %cst_87 = arith.constant dense<0xFF800000> : vector<8xf32>
    %216 = vector.multi_reduction <maximumf>, %215, %cst_87 [1] : vector<8x128xf32> to vector<8xf32>
    %217 = vector.shape_cast %216 : vector<8xf32> to vector<8x1xf32>
    %218 = vector.broadcast %217 : vector<8x1xf32> to vector<8x128xf32>
    %219 = arith.subf %215, %218 : vector<8x128xf32>
    %220 = math.exp %219 : vector<8x128xf32>
    %cst_88 = arith.constant dense<0.000000e+00> : vector<8xf32>
    %221 = vector.multi_reduction <add>, %220, %cst_88 [1] : vector<8x128xf32> to vector<8xf32>
    %222 = vector.shape_cast %221 : vector<8xf32> to vector<8x1xf32>
    %223 = vector.broadcast %222 : vector<8x1xf32> to vector<8x128xf32>
    %224 = arith.divf %220, %223 : vector<8x128xf32>
    %c0_89 = arith.constant 0 : index
    %c0_90 = arith.constant 0 : index
    %225 = vector.load %arg18[%c0_89, %c0_90] : memref<8x128xf32, #tpu.memory_space<vmem>>, vector<8x128xf32>
    tpu.vector_store %arg18[%c0_89, %c0_90], %224 {strides = array<i32>} : memref<8x128xf32, #tpu.memory_space<vmem>>, vector<8x128xf32>,
    return
  }
  func.func @transform_0(%arg0: i32) -> (i32, i32) {
    %c0_i32 = arith.constant 0 : i32
    %c0_i32_0 = arith.constant 0 : i32
    return %arg0, %c0_i32 : i32, i32
  }
  func.func @transform_1(%arg0: i32) -> (i32, i32) {
    %c0_i32 = arith.constant 0 : i32
    %c0_i32_0 = arith.constant 0 : i32
    %c0_i32_1 = arith.constant 0 : i32
    return %c0_i32, %c0_i32_0 : i32, i32
  }
  func.func @transform_2(%arg0: i32) -> (i32, i32) {
    %c0_i32 = arith.constant 0 : i32
    %c0_i32_0 = arith.constant 0 : i32
    %c0_i32_1 = arith.constant 0 : i32
    return %c0_i32, %c0_i32_0 : i32, i32
  }
  func.func @transform_3(%arg0: i32) -> (i32, i32) {
    %c0_i32 = arith.constant 0 : i32
    %c0_i32_0 = arith.constant 0 : i32
    %c0_i32_1 = arith.constant 0 : i32
    return %c0_i32, %c0_i32_0 : i32, i32
  }
  func.func @transform_4(%arg0: i32) -> (i32, i32) {
    %c0_i32 = arith.constant 0 : i32
    %c0_i32_0 = arith.constant 0 : i32
    %c0_i32_1 = arith.constant 0 : i32
    return %c0_i32, %c0_i32_0 : i32, i32
  }
  func.func @transform_5(%arg0: i32) -> (i32, i32, i32) {
    %c0_i32 = arith.constant 0 : i32
    %c0_i32_0 = arith.constant 0 : i32
    %c0_i32_1 = arith.constant 0 : i32
    %c0_i32_2 = arith.constant 0 : i32
    return %c0_i32, %c0_i32_0, %c0_i32_1 : i32, i32, i32
  }
  func.func @transform_6(%arg0: i32) -> (i32, i32, i32) {
    %c0_i32 = arith.constant 0 : i32
    %c0_i32_0 = arith.constant 0 : i32
    %c0_i32_1 = arith.constant 0 : i32
    %c0_i32_2 = arith.constant 0 : i32
    return %c0_i32, %c0_i32_0, %c0_i32_1 : i32, i32, i32
  }
  func.func @transform_7(%arg0: i32) -> (i32, i32, i32) {
    %c0_i32 = arith.constant 0 : i32
    %c0_i32_0 = arith.constant 0 : i32
    %c0_i32_1 = arith.constant 0 : i32
    %c0_i32_2 = arith.constant 0 : i32
    return %c0_i32, %c0_i32_0, %c0_i32_1 : i32, i32, i32
  }
  func.func @transform_8(%arg0: i32) -> (i32, i32, i32) {
    %c0_i32 = arith.constant 0 : i32
    %c0_i32_0 = arith.constant 0 : i32
    %c0_i32_1 = arith.constant 0 : i32
    %c0_i32_2 = arith.constant 0 : i32
    return %c0_i32, %c0_i32_0, %c0_i32_1 : i32, i32, i32
  }
  func.func @transform_9(%arg0: i32) -> (i32, i32, i32) {
    %c0_i32 = arith.constant 0 : i32
    %c0_i32_0 = arith.constant 0 : i32
    %c0_i32_1 = arith.constant 0 : i32
    %c0_i32_2 = arith.constant 0 : i32
    return %c0_i32, %c0_i32_0, %c0_i32_1 : i32, i32, i32
  }
  func.func @transform_10(%arg0: i32) -> (i32, i32, i32) {
    %c0_i32 = arith.constant 0 : i32
    %c0_i32_0 = arith.constant 0 : i32
    %c0_i32_1 = arith.constant 0 : i32
    %c0_i32_2 = arith.constant 0 : i32
    return %c0_i32, %c0_i32_0, %c0_i32_1 : i32, i32, i32
  }
  func.func @transform_11(%arg0: i32) -> (i32, i32, i32) {
    %c0_i32 = arith.constant 0 : i32
    %c0_i32_0 = arith.constant 0 : i32
    %c0_i32_1 = arith.constant 0 : i32
    %c0_i32_2 = arith.constant 0 : i32
    return %c0_i32, %c0_i32_0, %c0_i32_1 : i32, i32, i32
  }
  func.func @transform_12(%arg0: i32) -> (i32, i32, i32) {
    %c0_i32 = arith.constant 0 : i32
    %c0_i32_0 = arith.constant 0 : i32
    %c0_i32_1 = arith.constant 0 : i32
    %c0_i32_2 = arith.constant 0 : i32
    return %c0_i32, %c0_i32_0, %c0_i32_1 : i32, i32, i32
  }
  func.func @transform_13(%arg0: i32) -> (i32, i32) {
    %c0_i32 = arith.constant 0 : i32
    %c0_i32_0 = arith.constant 0 : i32
    %c0_i32_1 = arith.constant 0 : i32
    return %c0_i32, %c0_i32_0 : i32, i32
  }
  func.func @transform_14(%arg0: i32) -> (i32, i32) {
    %c0_i32 = arith.constant 0 : i32
    %c0_i32_0 = arith.constant 0 : i32
    %c0_i32_1 = arith.constant 0 : i32
    return %c0_i32, %c0_i32_0 : i32, i32
  }
  func.func @transform_15(%arg0: i32) -> (i32, i32) {
    %c0_i32 = arith.constant 0 : i32
    %c0_i32_0 = arith.constant 0 : i32
    %c0_i32_1 = arith.constant 0 : i32
    return %c0_i32, %c0_i32_0 : i32, i32
  }
  func.func @transform_16(%arg0: i32) -> (i32, i32) {
    %c0_i32 = arith.constant 0 : i32
    %c0_i32_0 = arith.constant 0 : i32
    %c0_i32_1 = arith.constant 0 : i32
    return %c0_i32, %c0_i32_0 : i32, i32
  }
  func.func @transform_17(%arg0: i32) -> (i32, i32) {
    %c0_i32 = arith.constant 0 : i32
    %c0_i32_0 = arith.constant 0 : i32
    return %arg0, %c0_i32 : i32, i32
  }
}

</mosaic_0001>

<llo_original>
// kernel: linear_resnet_forward.1
$region0: #{linear_resnet_forward.1}
  #allocation0 [shape = 'u32[]', space=smem, size = 0x4, offset = 0x4, fixed_abs, tag = 'smem constant byte address 0x4 - core index']
  #allocation1 [shape = 'u32[72,128]{1,0:T(1,128)}', space=vmem, size = 0x9000, scoped, tag = 'internal scratch']
  %s0 = inlined_call_operand.vmem [shape: f32[8,128], index: 0, kind: input, shape index: {}]
  %s1 = inlined_call_operand.hbm [shape: bf16[128,128], index: 1, kind: input, shape index: {}]
  %s2 = inlined_call_operand.vmem [shape: f32[1,128], index: 2, kind: input, shape index: {}]
  %s3 = inlined_call_operand.vmem [shape: f32[1,128], index: 3, kind: input, shape index: {}]
  %s4 = inlined_call_operand.vmem [shape: f32[1,128], index: 4, kind: input, shape index: {}]
  %s5 = inlined_call_operand.hbm [shape: bf16[2,128,128], index: 5, kind: input, shape index: {}]
  %s6 = inlined_call_operand.vmem [shape: f32[2,1,128], index: 6, kind: input, shape index: {}]
  %s7 = inlined_call_operand.vmem [shape: f32[2,1,128], index: 7, kind: input, shape index: {}]
  %s8 = inlined_call_operand.vmem [shape: f32[2,1,128], index: 8, kind: input, shape index: {}]
  %s9 = inlined_call_operand.hbm [shape: bf16[2,128,128], index: 9, kind: input, shape index: {}]
  %s10 = inlined_call_operand.vmem [shape: f32[2,1,128], index: 10, kind: input, shape index: {}]
  %s11 = inlined_call_operand.vmem [shape: f32[2,1,128], index: 11, kind: input, shape index: {}]
  %s12 = inlined_call_operand.vmem [shape: f32[2,1,128], index: 12, kind: input, shape index: {}]
  %s13 = inlined_call_operand.hbm [shape: bf16[128,128], index: 13, kind: input, shape index: {}]
  %s14 = inlined_call_operand.vmem [shape: f32[1,128], index: 14, kind: input, shape index: {}]
  %s15 = inlined_call_operand.hbm [shape: bf16[128,128], index: 15, kind: input, shape index: {}]
  %s16 = inlined_call_operand.vmem [shape: f32[1,128], index: 16, kind: input, shape index: {}]
  %s17 = inlined_call_operand.vmem [shape: f32[8,128], index: 17, kind: output, shape index: {}]
  %s18 = sld [smem:[#allocation0]]
  $region98: #{linear_resnet_forward.1} parent=0
    _
  %s20 = ssub.s32 1, %s18
  %s21 = scalar_select 0, %s20, %s18
  $region1: #{linear_resnet_forward.1} parent=0
    #allocation2 [shape = 'u8[32768]{0}', space=vmem, size = 0x8000, scoped, tag = 'input window, operand 1, single buffered']
    #allocation3 [shape = 's32[1]{0}', space=sflag, size = 0x4, scoped, tag = 'scoped memory for linear_resnet_forward.1']
    #allocation4 [shape = 'u8[65536]{0}', space=vmem, size = 0x10000, scoped, tag = 'input window, operand 5, single buffered']
    #allocation5 [shape = 's32[1]{0}', space=sflag, size = 0x4, scoped, tag = 'scoped memory for linear_resnet_forward.1']
    #allocation6 [shape = 'u8[65536]{0}', space=vmem, size = 0x10000, scoped, tag = 'input window, operand 9, single buffered']
    #allocation7 [shape = 'u8[32768]{0}', space=vmem, size = 0x8000, scoped, tag = 'input window, operand 13, single buffered']
    #allocation8 [shape = 's32[1]{0}', space=sflag, size = 0x4, scoped, tag = 'scoped memory for linear_resnet_forward.1']
    #allocation9 [shape = 'u8[32768]{0}', space=vmem, size = 0x8000, scoped, tag = 'input window, operand 15, single buffered']
    %22 = vsyncpa [#allocation3], 0
    %23 = vsyncpa [#allocation5], 0
    %24 = vsyncpa [#allocation8], 0
    // Predicated region
    $region2: #{linear_resnet_forward.1} parent=1 // pred_check
      _
    $region3: #{linear_resnet_forward.1} parent=1 // pred_check_branch
      %26 = sbr.rel (0) target = $region5
    $region4: #{linear_resnet_forward.1} parent=1 // pred_region
      _
    $region5: #{linear_resnet_forward.1} parent=1 // pred_fallthru
      _
    // Predicated region
    $region6: #{linear_resnet_forward.1} parent=1 // pred_check
      _
    $region7: #{linear_resnet_forward.1} parent=1 // pred_check_branch
      %28 = sbr.rel (0) target = $region9
    $region8: #{linear_resnet_forward.1} parent=1 // pred_region
      %30 = vsyncadd [#allocation3], 0
      %s31 = sshll.u32 %s1, 4
      %s32 = int_to_ptr.hbm [resolvable:$true] %s31
      %s33 = sshll.u32 [#allocation2], 4
      %s34 = int_to_ptr.vmem [resolvable:$true] %s33
      %39 = dma.hbm_to_vmem [thread:$0]  %s32, 1024, %s34, [#allocation3], 64, 64, 4
    $region9: #{linear_resnet_forward.1} parent=1 // pred_fallthru
      _
    // Predicated region
    $region10: #{linear_resnet_forward.1} parent=1 // pred_check
      _
    $region11: #{linear_resnet_forward.1} parent=1 // pred_check_branch
      %41 = sbr.rel (0) target = $region13
    $region12: #{linear_resnet_forward.1} parent=1 // pred_region
      _
    $region13: #{linear_resnet_forward.1} parent=1 // pred_fallthru
      _
    // Predicated region
    $region14: #{linear_resnet_forward.1} parent=1 // pred_check
      _
    $region15: #{linear_resnet_forward.1} parent=1 // pred_check_branch
      %43 = sbr.rel (0) target = $region17
    $region16: #{linear_resnet_forward.1} parent=1 // pred_region
      _
    $region17: #{linear_resnet_forward.1} parent=1 // pred_fallthru
      _
    // Predicated region
    $region18: #{linear_resnet_forward.1} parent=1 // pred_check
      _
    $region19: #{linear_resnet_forward.1} parent=1 // pred_check_branch
      %45 = sbr.rel (0) target = $region21
    $region20: #{linear_resnet_forward.1} parent=1 // pred_region
      _
    $region21: #{linear_resnet_forward.1} parent=1 // pred_fallthru
      _
    // Predicated region
    $region22: #{linear_resnet_forward.1} parent=1 // pred_check
      _
    $region23: #{linear_resnet_forward.1} parent=1 // pred_check_branch
      %47 = sbr.rel (0) target = $region25
    $region24: #{linear_resnet_forward.1} parent=1 // pred_region
      %49 = vsyncadd [#allocation5], 0
      %s50 = sshll.u32 %s5, 4
      %s51 = int_to_ptr.hbm [resolvable:$true] %s50
      %s52 = sshll.u32 [#allocation4], 4
      %s53 = int_to_ptr.vmem [resolvable:$true] %s52
      %58 = dma.hbm_to_vmem [thread:$0]  %s51, 2048, %s53, [#allocation5], 64, 64, 4
    $region25: #{linear_resnet_forward.1} parent=1 // pred_fallthru
      _
    // Predicated region
    $region26: #{linear_resnet_forward.1} parent=1 // pred_check
      _
    $region27: #{linear_resnet_forward.1} parent=1 // pred_check_branch
      %60 = sbr.rel (0) target = $region29
    $region28: #{linear_resnet_forward.1} parent=1 // pred_region
      _
    $region29: #{linear_resnet_forward.1} parent=1 // pred_fallthru
      _
    // Predicated region
    $region30: #{linear_resnet_forward.1} parent=1 // pred_check
      _
    $region31: #{linear_resnet_forward.1} parent=1 // pred_check_branch
      %62 = sbr.rel (0) target = $region33
    $region32: #{linear_resnet_forward.1} parent=1 // pred_region
      _
    $region33: #{linear_resnet_forward.1} parent=1 // pred_fallthru
      _
    // Predicated region
    $region34: #{linear_resnet_forward.1} parent=1 // pred_check
      _
    $region35: #{linear_resnet_forward.1} parent=1 // pred_check_branch
      %64 = sbr.rel (0) target = $region37
    $region36: #{linear_resnet_forward.1} parent=1 // pred_region
      _
    $region37: #{linear_resnet_forward.1} parent=1 // pred_fallthru
      _
    // Predicated region
    $region38: #{linear_resnet_forward.1} parent=1 // pred_check
      _
    $region39: #{linear_resnet_forward.1} parent=1 // pred_check_branch
      %66 = sbr.rel (0) target = $region41
    $region40: #{linear_resnet_forward.1} parent=1 // pred_region
      %68 = vsyncadd [#allocation5], 0
      %s69 = sshll.u32 %s9, 4
      %s70 = int_to_ptr.hbm [resolvable:$true] %s69
      %s71 = sshll.u32 [#allocation6], 4
      %s72 = int_to_ptr.vmem [resolvable:$true] %s71
      %77 = dma.hbm_to_vmem [thread:$0]  %s70, 2048, %s72, [#allocation5], 64, 64, 4
    $region41: #{linear_resnet_forward.1} parent=1 // pred_fallthru
      _
    // Predicated region
    $region42: #{linear_resnet_forward.1} parent=1 // pred_check
      _
    $region43: #{linear_resnet_forward.1} parent=1 // pred_check_branch
      %79 = sbr.rel (0) target = $region45
    $region44: #{linear_resnet_forward.1} parent=1 // pred_region
      _
    $region45: #{linear_resnet_forward.1} parent=1 // pred_fallthru
      _
    // Predicated region
    $region46: #{linear_resnet_forward.1} parent=1 // pred_check
      _
    $region47: #{linear_resnet_forward.1} parent=1 // pred_check_branch
      %81 = sbr.rel (0) target = $region49
    $region48: #{linear_resnet_forward.1} parent=1 // pred_region
      _
    $region49: #{linear_resnet_forward.1} parent=1 // pred_fallthru
      _
    // Predicated region
    $region50: #{linear_resnet_forward.1} parent=1 // pred_check
      _
    $region51: #{linear_resnet_forward.1} parent=1 // pred_check_branch
      %83 = sbr.rel (0) target = $region53
    $region52: #{linear_resnet_forward.1} parent=1 // pred_region
      _
    $region53: #{linear_resnet_forward.1} parent=1 // pred_fallthru
      _
    // Predicated region
    $region54: #{linear_resnet_forward.1} parent=1 // pred_check
      _
    $region55: #{linear_resnet_forward.1} parent=1 // pred_check_branch
      %85 = sbr.rel (0) target = $region57
    $region56: #{linear_resnet_forward.1} parent=1 // pred_region
      %87 = vsyncadd [#allocation8], 0
      %s88 = sshll.u32 %s13, 4
      %s89 = int_to_ptr.hbm [resolvable:$true] %s88
      %s90 = sshll.u32 [#allocation7], 4
      %s91 = int_to_ptr.vmem [resolvable:$true] %s90
      %96 = dma.hbm_to_vmem [thread:$0]  %s89, 1024, %s91, [#allocation8], 64, 64, 4
    $region57: #{linear_resnet_forward.1} parent=1 // pred_fallthru
      _
    // Predicated region
    $region58: #{linear_resnet_forward.1} parent=1 // pred_check
      _
    $region59: #{linear_resnet_forward.1} parent=1 // pred_check_branch
      %98 = sbr.rel (0) target = $region61
    $region60: #{linear_resnet_forward.1} parent=1 // pred_region
      _
    $region61: #{linear_resnet_forward.1} parent=1 // pred_fallthru
      _
    // Predicated region
    $region62: #{linear_resnet_forward.1} parent=1 // pred_check
      _
    $region63: #{linear_resnet_forward.1} parent=1 // pred_check_branch
      %100 = sbr.rel (0) target = $region65
    $region64: #{linear_resnet_forward.1} parent=1 // pred_region
      %102 = vsyncadd [#allocation8], 0
      %s103 = sshll.u32 %s15, 4
      %s104 = int_to_ptr.hbm [resolvable:$true] %s103
      %s105 = sshll.u32 [#allocation9], 4
      %s106 = int_to_ptr.vmem [resolvable:$true] %s105
      %111 = dma.hbm_to_vmem [thread:$0]  %s104, 1024, %s106, [#allocation8], 64, 64, 4
    $region65: #{linear_resnet_forward.1} parent=1 // pred_fallthru
      _
    // Predicated region
    $region66: #{linear_resnet_forward.1} parent=1 // pred_check
      _
    $region67: #{linear_resnet_forward.1} parent=1 // pred_check_branch
      %113 = sbr.rel (0) target = $region69
    $region68: #{linear_resnet_forward.1} parent=1 // pred_region
      _
    $region69: #{linear_resnet_forward.1} parent=1 // pred_fallthru
      _
    // Predicated region
    $region70: #{linear_resnet_forward.1} parent=1 // pred_check
      _
    $region71: #{linear_resnet_forward.1} parent=1 // pred_check_branch
      %115 = sbr.rel (0) target = $region73
    $region72: #{linear_resnet_forward.1} parent=1 // pred_region
      %117 = dma.done [#allocation3], 1024
    $region73: #{linear_resnet_forward.1} parent=1 // pred_fallthru
      _
    // Predicated region
    $region74: #{linear_resnet_forward.1} parent=1 // pred_check
      _
    $region75: #{linear_resnet_forward.1} parent=1 // pred_check_branch
      %119 = sbr.rel (0) target = $region77
    $region76: #{linear_resnet_forward.1} parent=1 // pred_region
      %121 = dma.done [#allocation5], 2048
    $region77: #{linear_resnet_forward.1} parent=1 // pred_fallthru
      _
    // Predicated region
    $region78: #{linear_resnet_forward.1} parent=1 // pred_check
      _
    $region79: #{linear_resnet_forward.1} parent=1 // pred_check_branch
      %123 = sbr.rel (0) target = $region81
    $region80: #{linear_resnet_forward.1} parent=1 // pred_region
      %125 = dma.done [#allocation5], 2048
    $region81: #{linear_resnet_forward.1} parent=1 // pred_fallthru
      _
    // Predicated region
    $region82: #{linear_resnet_forward.1} parent=1 // pred_check
      _
    $region83: #{linear_resnet_forward.1} parent=1 // pred_check_branch
      %127 = sbr.rel (0) target = $region85
    $region84: #{linear_resnet_forward.1} parent=1 // pred_region
      %129 = dma.done [#allocation8], 1024
    $region85: #{linear_resnet_forward.1} parent=1 // pred_fallthru
      _
    // Predicated region
    $region86: #{linear_resnet_forward.1} parent=1 // pred_check
      _
    $region87: #{linear_resnet_forward.1} parent=1 // pred_check_branch
      %131 = sbr.rel (0) target = $region89
    $region88: #{linear_resnet_forward.1} parent=1 // pred_region
      %133 = dma.done [#allocation8], 1024
    $region89: #{linear_resnet_forward.1} parent=1 // pred_fallthru
      _
    %v134 = vlaneseq
    %v135 = vand.u32 %v134, 127
    %vm136 = vcmp.lt.s32.totalorder %v135, 8
    %v137 = vld [vmem:[%s0] sm:$0xff]
    %v138 = vld [vmem:[#allocation2] sm:$0xf]
    %v139 = vld [vmem:[#allocation2 + $0x4] sm:$0xf]
    %v140 = vld [vmem:[#allocation2 + $0x8] sm:$0xf]
    %v141 = vld [vmem:[#allocation2 + $0xc] sm:$0xf]
    %v142 = vld [vmem:[#allocation2 + $0x10] sm:$0xf]
    %v143 = vld [vmem:[#allocation2 + $0x14] sm:$0xf]
    %v144 = vld [vmem:[#allocation2 + $0x18] sm:$0xf]
    %v145 = vld [vmem:[#allocation2 + $0x1c] sm:$0xf]
    %v146 = vld [vmem:[#allocation2 + $0x20] sm:$0xf]
    %v147 = vld [vmem:[#allocation2 + $0x24] sm:$0xf]
    %v148 = vld [vmem:[#allocation2 + $0x28] sm:$0xf]
    %v149 = vld [vmem:[#allocation2 + $0x2c] sm:$0xf]
    %v150 = vld [vmem:[#allocation2 + $0x30] sm:$0xf]
    %v151 = vld [vmem:[#allocation2 + $0x34] sm:$0xf]
    %v152 = vld [vmem:[#allocation2 + $0x38] sm:$0xf]
    %v153 = vld [vmem:[#allocation2 + $0x3c] sm:$0xf]
    %v154 = vpack.c.bf16 %v137, %v137
    %v155 = vld [vmem:[%s2] sm:$0x1]
    %v157 = vperm.slane %v155, 0
    %v175 = vunpack.c.l.b16 %v138
    %v176 = vunpack.c.l.b16 %v139
    %v177 = vunpack.c.l.b16 %v140
    %v178 = vunpack.c.l.b16 %v141
    %v179 = vunpack.c.l.b16 %v142
    %v180 = vunpack.c.l.b16 %v143
    %v181 = vunpack.c.l.b16 %v144
    %v182 = vunpack.c.l.b16 %v145
    %v183 = vunpack.c.l.b16 %v146
    %v184 = vunpack.c.l.b16 %v147
    %v185 = vunpack.c.l.b16 %v148
    %v186 = vunpack.c.l.b16 %v149
    %v187 = vunpack.c.l.b16 %v150
    %v188 = vunpack.c.l.b16 %v151
    %v189 = vunpack.c.l.b16 %v152
    %v190 = vunpack.c.l.b16 %v153
    %v191 = vpack.c.b16 %v176, %v175
    %v192 = vpack.c.b16 %v178, %v177
    %v193 = vpack.c.b16 %v180, %v179
    %v194 = vpack.c.b16 %v182, %v181
    %v195 = vpack.c.b16 %v184, %v183
    %v196 = vpack.c.b16 %v186, %v185
    %v197 = vpack.c.b16 %v188, %v187
    %v198 = vpack.c.b16 %v190, %v189
    %207 = vmatpush.bf16.msra.mxu0 %v198
    %208 = vmatpush.bf16.msra.mxu0 %v197
    %209 = vmatpush.bf16.msra.mxu0 %v196
    %210 = vmatpush.bf16.msra.mxu0 %v195
    %211 = vmatpush.bf16.msra.mxu0 %v194
    %212 = vmatpush.bf16.msra.mxu0 %v193
    %213 = vmatpush.bf16.msra.mxu0 %v192
    %214 = vmatpush.bf16.msra.mxu0 %v191
    %215 = vmatmul.bf16.gmra.mxu0 %v154
    %v216 = vpop.f32.mrf.mxu0
    %v217 = vadd.f32 %v157, %v216
    %v218 = vpop.f32.mrf.mxu0
    %219 = vdwg.mxu0
    %v220 = vld [vmem:[%s3] sm:$0x1]
    %v221 = vld [vmem:[%s4] sm:$0x1]
    %222 = vadd.xlane.f32.xlu0 %v217
    %v223 = vpop.xlane.xlu0 %222
    %v224 = vmul.f32 %v217, %v217
    %225 = vadd.xlane.f32.xlu0 %v224
    %v226 = vpop.xlane.xlu0 %225
    %v227 = vmul.f32 %v223, 0.03125
    %v228 = vmul.f32 %v226, 0.03125
    %v229 = vmul.f32 %v227, %v227
    %v230 = vsub.f32 %v228, %v229
    %v231 = vsub.f32 %v217, %v227
    %v232 = vadd.f32 %v230, 1e-05
    %v233 = vrsqrt.pop %v232
    %v234 = vmul.f32 %v233, %v232
    %v235 = vmul.f32 %v234, %v233
    %v236 = vmul.f32 0.5, %v235
    %v237 = vsub.f32 1.5, %v236
    %v238 = vmul.f32 %v233, %v237
    %vm239 = vweird.f32 %v232
    %vm240 = vweird.f32 %v233
    %vm241 = vmor %vm239, %vm240
    %v242 = vsel %vm241, %v233, %v238
    %v243 = vmul.f32 %v231, %v242
    %v245 = vperm.slane %v220, 0
    %v247 = vmul.f32 %v243, %v245
    %v249 = vperm.slane %v221, 0
    %v251 = vadd.f32 %v247, %v249
    %v252 = vmax.f32 %v251, 0.0
    %v253 = vld [vmem:[#allocation4] sm:$0xf]
    %v254 = vld [vmem:[#allocation4 + $0x4] sm:$0xf]
    %v255 = vld [vmem:[#allocation4 + $0x8] sm:$0xf]
    %v256 = vld [vmem:[#allocation4 + $0xc] sm:$0xf]
    %v257 = vld [vmem:[#allocation4 + $0x10] sm:$0xf]
    %v258 = vld [vmem:[#allocation4 + $0x14] sm:$0xf]
    %v259 = vld [vmem:[#allocation4 + $0x18] sm:$0xf]
    %v260 = vld [vmem:[#allocation4 + $0x1c] sm:$0xf]
    %v261 = vld [vmem:[#allocation4 + $0x20] sm:$0xf]
    %v262 = vld [vmem:[#allocation4 + $0x24] sm:$0xf]
    %v263 = vld [vmem:[#allocation4 + $0x28] sm:$0xf]
    %v264 = vld [vmem:[#allocation4 + $0x2c] sm:$0xf]
    %v265 = vld [vmem:[#allocation4 + $0x30] sm:$0xf]
    %v266 = vld [vmem:[#allocation4 + $0x34] sm:$0xf]
    %v267 = vld [vmem:[#allocation4 + $0x38] sm:$0xf]
    %v268 = vld [vmem:[#allocation4 + $0x3c] sm:$0xf]
    %v269 = vpack.c.bf16 %v252, %v252
    %v270 = vld [vmem:[%s6] sm:$0x1]
    %v272 = vperm.slane %v270, 0
    %v290 = vunpack.c.l.b16 %v253
    %v291 = vunpack.c.l.b16 %v254
    %v292 = vunpack.c.l.b16 %v255
    %v293 = vunpack.c.l.b16 %v256
    %v294 = vunpack.c.l.b16 %v257
    %v295 = vunpack.c.l.b16 %v258
    %v296 = vunpack.c.l.b16 %v259
    %v297 = vunpack.c.l.b16 %v260
    %v298 = vunpack.c.l.b16 %v261
    %v299 = vunpack.c.l.b16 %v262
    %v300 = vunpack.c.l.b16 %v263
    %v301 = vunpack.c.l.b16 %v264
    %v302 = vunpack.c.l.b16 %v265
    %v303 = vunpack.c.l.b16 %v266
    %v304 = vunpack.c.l.b16 %v267
    %v305 = vunpack.c.l.b16 %v268
    %v306 = vpack.c.b16 %v291, %v290
    %v307 = vpack.c.b16 %v293, %v292
    %v308 = vpack.c.b16 %v295, %v294
    %v309 = vpack.c.b16 %v297, %v296
    %v310 = vpack.c.b16 %v299, %v298
    %v311 = vpack.c.b16 %v301, %v300
    %v312 = vpack.c.b16 %v303, %v302
    %v313 = vpack.c.b16 %v305, %v304
    %322 = vmatpush.bf16.msra.mxu0 %v313
    %323 = vmatpush.bf16.msra.mxu0 %v312
    %324 = vmatpush.bf16.msra.mxu0 %v311
    %325 = vmatpush.bf16.msra.mxu0 %v310
    %326 = vmatpush.bf16.msra.mxu0 %v309
    %327 = vmatpush.bf16.msra.mxu0 %v308
    %328 = vmatpush.bf16.msra.mxu0 %v307
    %329 = vmatpush.bf16.msra.mxu0 %v306
    %330 = vmatmul.bf16.gmra.mxu0 %v269
    %v331 = vpop.f32.mrf.mxu0
    %v332 = vadd.f32 %v272, %v331
    %v333 = vpop.f32.mrf.mxu0
    %334 = vdwg.mxu0
    %v335 = vld [vmem:[%s7] sm:$0x1]
    %v336 = vld [vmem:[%s8] sm:$0x1]
    %337 = vadd.xlane.f32.xlu0 %v332
    %v338 = vpop.xlane.xlu0 %337
    %v339 = vmul.f32 %v332, %v332
    %340 = vadd.xlane.f32.xlu0 %v339
    %v341 = vpop.xlane.xlu0 %340
    %v342 = vmul.f32 %v338, 0.03125
    %v343 = vmul.f32 %v341, 0.03125
    %v344 = vmul.f32 %v342, %v342
    %v345 = vsub.f32 %v343, %v344
    %v346 = vsub.f32 %v332, %v342
    %v347 = vadd.f32 %v345, 1e-05
    %v348 = vrsqrt.pop %v347
    %v349 = vmul.f32 %v348, %v347
    %v350 = vmul.f32 %v349, %v348
    %v351 = vmul.f32 0.5, %v350
    %v352 = vsub.f32 1.5, %v351
    %v353 = vmul.f32 %v348, %v352
    %vm354 = vweird.f32 %v347
    %vm355 = vweird.f32 %v348
    %vm356 = vmor %vm354, %vm355
    %v357 = vsel %vm356, %v348, %v353
    %v358 = vmul.f32 %v346, %v357
    %v360 = vperm.slane %v335, 0
    %v362 = vmul.f32 %v358, %v360
    %v364 = vperm.slane %v336, 0
    %v366 = vadd.f32 %v362, %v364
    %v367 = vmax.f32 %v366, 0.0
    %v368 = vld [vmem:[#allocation6] sm:$0xf]
    %v369 = vld [vmem:[#allocation6 + $0x4] sm:$0xf]
    %v370 = vld [vmem:[#allocation6 + $0x8] sm:$0xf]
    %v371 = vld [vmem:[#allocation6 + $0xc] sm:$0xf]
    %v372 = vld [vmem:[#allocation6 + $0x10] sm:$0xf]
    %v373 = vld [vmem:[#allocation6 + $0x14] sm:$0xf]
    %v374 = vld [vmem:[#allocation6 + $0x18] sm:$0xf]
    %v375 = vld [vmem:[#allocation6 + $0x1c] sm:$0xf]
    %v376 = vld [vmem:[#allocation6 + $0x20] sm:$0xf]
    %v377 = vld [vmem:[#allocation6 + $0x24] sm:$0xf]
    %v378 = vld [vmem:[#allocation6 + $0x28] sm:$0xf]
    %v379 = vld [vmem:[#allocation6 + $0x2c] sm:$0xf]
    %v380 = vld [vmem:[#allocation6 + $0x30] sm:$0xf]
    %v381 = vld [vmem:[#allocation6 + $0x34] sm:$0xf]
    %v382 = vld [vmem:[#allocation6 + $0x38] sm:$0xf]
    %v383 = vld [vmem:[#allocation6 + $0x3c] sm:$0xf]
    %v384 = vpack.c.bf16 %v367, %v367
    %v385 = vld [vmem:[%s10] sm:$0x1]
    %v387 = vperm.slane %v385, 0
    %v405 = vunpack.c.l.b16 %v368
    %v406 = vunpack.c.l.b16 %v369
    %v407 = vunpack.c.l.b16 %v370
    %v408 = vunpack.c.l.b16 %v371
    %v409 = vunpack.c.l.b16 %v372
    %v410 = vunpack.c.l.b16 %v373
    %v411 = vunpack.c.l.b16 %v374
    %v412 = vunpack.c.l.b16 %v375
    %v413 = vunpack.c.l.b16 %v376
    %v414 = vunpack.c.l.b16 %v377
    %v415 = vunpack.c.l.b16 %v378
    %v416 = vunpack.c.l.b16 %v379
    %v417 = vunpack.c.l.b16 %v380
    %v418 = vunpack.c.l.b16 %v381
    %v419 = vunpack.c.l.b16 %v382
    %v420 = vunpack.c.l.b16 %v383
    %v421 = vpack.c.b16 %v406, %v405
    %v422 = vpack.c.b16 %v408, %v407
    %v423 = vpack.c.b16 %v410, %v409
    %v424 = vpack.c.b16 %v412, %v411
    %v425 = vpack.c.b16 %v414, %v413
    %v426 = vpack.c.b16 %v416, %v415
    %v427 = vpack.c.b16 %v418, %v417
    %v428 = vpack.c.b16 %v420, %v419
    %437 = vmatpush.bf16.msra.mxu0 %v428
    %438 = vmatpush.bf16.msra.mxu0 %v427
    %439 = vmatpush.bf16.msra.mxu0 %v426
    %440 = vmatpush.bf16.msra.mxu0 %v425
    %441 = vmatpush.bf16.msra.mxu0 %v424
    %442 = vmatpush.bf16.msra.mxu0 %v423
    %443 = vmatpush.bf16.msra.mxu0 %v422
    %444 = vmatpush.bf16.msra.mxu0 %v421
    %445 = vmatmul.bf16.gmra.mxu0 %v384
    %v446 = vpop.f32.mrf.mxu0
    %v447 = vadd.f32 %v387, %v446
    %v448 = vpop.f32.mrf.mxu0
    %449 = vdwg.mxu0
    %v450 = vld [vmem:[%s11] sm:$0x1]
    %v451 = vld [vmem:[%s12] sm:$0x1]
    %452 = vadd.xlane.f32.xlu0 %v447
    %v453 = vpop.xlane.xlu0 %452
    %v454 = vmul.f32 %v447, %v447
    %455 = vadd.xlane.f32.xlu0 %v454
    %v456 = vpop.xlane.xlu0 %455
    %v457 = vmul.f32 %v453, 0.03125
    %v458 = vmul.f32 %v456, 0.03125
    %v459 = vmul.f32 %v457, %v457
    %v460 = vsub.f32 %v458, %v459
    %v461 = vsub.f32 %v447, %v457
    %v462 = vadd.f32 %v460, 1e-05
    %v463 = vrsqrt.pop %v462
    %v464 = vmul.f32 %v463, %v462
    %v465 = vmul.f32 %v464, %v463
    %v466 = vmul.f32 0.5, %v465
    %v467 = vsub.f32 1.5, %v466
    %v468 = vmul.f32 %v463, %v467
    %vm469 = vweird.f32 %v462
    %vm470 = vweird.f32 %v463
    %vm471 = vmor %vm469, %vm470
    %v472 = vsel %vm471, %v463, %v468
    %v473 = vmul.f32 %v461, %v472
    %v475 = vperm.slane %v450, 0
    %v477 = vmul.f32 %v473, %v475
    %v479 = vperm.slane %v451, 0
    %v481 = vadd.f32 %v477, %v479
    %v482 = vadd.f32 %v481, %v252
    %v483 = vmax.f32 %v482, 0.0
    %s484 = scalar_lea.vmem [#allocation4], 64
    %v485 = vld [vmem:[%s484] sm:$0xf]
    %v486 = vld [vmem:[%s484 + $0x4] sm:$0xf]
    %v487 = vld [vmem:[%s484 + $0x8] sm:$0xf]
    %v488 = vld [vmem:[%s484 + $0xc] sm:$0xf]
    %v489 = vld [vmem:[%s484 + $0x10] sm:$0xf]
    %v490 = vld [vmem:[%s484 + $0x14] sm:$0xf]
    %v491 = vld [vmem:[%s484 + $0x18] sm:$0xf]
    %v492 = vld [vmem:[%s484 + $0x1c] sm:$0xf]
    %v493 = vld [vmem:[%s484 + $0x20] sm:$0xf]
    %v494 = vld [vmem:[%s484 + $0x24] sm:$0xf]
    %v495 = vld [vmem:[%s484 + $0x28] sm:$0xf]
    %v496 = vld [vmem:[%s484 + $0x2c] sm:$0xf]
    %v497 = vld [vmem:[%s484 + $0x30] sm:$0xf]
    %v498 = vld [vmem:[%s484 + $0x34] sm:$0xf]
    %v499 = vld [vmem:[%s484 + $0x38] sm:$0xf]
    %v500 = vld [vmem:[%s484 + $0x3c] sm:$0xf]
    %v501 = vpack.c.bf16 %v483, %v483
    %s502 = scalar_lea.vmem %s6, 1
    %v503 = vld [vmem:[%s502] sm:$0x1]
    %v505 = vperm.slane %v503, 0
    %v523 = vunpack.c.l.b16 %v485
    %v524 = vunpack.c.l.b16 %v486
    %v525 = vunpack.c.l.b16 %v487
    %v526 = vunpack.c.l.b16 %v488
    %v527 = vunpack.c.l.b16 %v489
    %v528 = vunpack.c.l.b16 %v490
    %v529 = vunpack.c.l.b16 %v491
    %v530 = vunpack.c.l.b16 %v492
    %v531 = vunpack.c.l.b16 %v493
    %v532 = vunpack.c.l.b16 %v494
    %v533 = vunpack.c.l.b16 %v495
    %v534 = vunpack.c.l.b16 %v496
    %v535 = vunpack.c.l.b16 %v497
    %v536 = vunpack.c.l.b16 %v498
    %v537 = vunpack.c.l.b16 %v499
    %v538 = vunpack.c.l.b16 %v500
    %v539 = vpack.c.b16 %v524, %v523
    %v540 = vpack.c.b16 %v526, %v525
    %v541 = vpack.c.b16 %v528, %v527
    %v542 = vpack.c.b16 %v530, %v529
    %v543 = vpack.c.b16 %v532, %v531
    %v544 = vpack.c.b16 %v534, %v533
    %v545 = vpack.c.b16 %v536, %v535
    %v546 = vpack.c.b16 %v538, %v537
    %555 = vmatpush.bf16.msra.mxu0 %v546
    %556 = vmatpush.bf16.msra.mxu0 %v545
    %557 = vmatpush.bf16.msra.mxu0 %v544
    %558 = vmatpush.bf16.msra.mxu0 %v543
    %559 = vmatpush.bf16.msra.mxu0 %v542
    %560 = vmatpush.bf16.msra.mxu0 %v541
    %561 = vmatpush.bf16.msra.mxu0 %v540
    %562 = vmatpush.bf16.msra.mxu0 %v539
    %563 = vmatmul.bf16.gmra.mxu0 %v501
    %v564 = vpop.f32.mrf.mxu0
    %v565 = vadd.f32 %v505, %v564
    %v566 = vpop.f32.mrf.mxu0
    %567 = vdwg.mxu0
    %s568 = scalar_lea.vmem %s7, 1
    %v569 = vld [vmem:[%s568] sm:$0x1]
    %s570 = scalar_lea.vmem %s8, 1
    %v571 = vld [vmem:[%s570] sm:$0x1]
    %572 = vadd.xlane.f32.xlu0 %v565
    %v573 = vpop.xlane.xlu0 %572
    %v574 = vmul.f32 %v565, %v565
    %575 = vadd.xlane.f32.xlu0 %v574
    %v576 = vpop.xlane.xlu0 %575
    %v577 = vmul.f32 %v573, 0.03125
    %v578 = vmul.f32 %v576, 0.03125
    %v579 = vmul.f32 %v577, %v577
    %v580 = vsub.f32 %v578, %v579
    %v581 = vsub.f32 %v565, %v577
    %v582 = vadd.f32 %v580, 1e-05
    %v583 = vrsqrt.pop %v582
    %v584 = vmul.f32 %v583, %v582
    %v585 = vmul.f32 %v584, %v583
    %v586 = vmul.f32 0.5, %v585
    %v587 = vsub.f32 1.5, %v586
    %v588 = vmul.f32 %v583, %v587
    %vm589 = vweird.f32 %v582
    %vm590 = vweird.f32 %v583
    %vm591 = vmor %vm589, %vm590
    %v592 = vsel %vm591, %v583, %v588
    %v593 = vmul.f32 %v581, %v592
    %v595 = vperm.slane %v569, 0
    %v597 = vmul.f32 %v593, %v595
    %v599 = vperm.slane %v571, 0
    %v601 = vadd.f32 %v597, %v599
    %v602 = vmax.f32 %v601, 0.0
    %s603 = scalar_lea.vmem [#allocation6], 64
    %v604 = vld [vmem:[%s603] sm:$0xf]
    %v605 = vld [vmem:[%s603 + $0x4] sm:$0xf]
    %v606 = vld [vmem:[%s603 + $0x8] sm:$0xf]
    %v607 = vld [vmem:[%s603 + $0xc] sm:$0xf]
    %v608 = vld [vmem:[%s603 + $0x10] sm:$0xf]
    %v609 = vld [vmem:[%s603 + $0x14] sm:$0xf]
    %v610 = vld [vmem:[%s603 + $0x18] sm:$0xf]
    %v611 = vld [vmem:[%s603 + $0x1c] sm:$0xf]
    %v612 = vld [vmem:[%s603 + $0x20] sm:$0xf]
    %v613 = vld [vmem:[%s603 + $0x24] sm:$0xf]
    %v614 = vld [vmem:[%s603 + $0x28] sm:$0xf]
    %v615 = vld [vmem:[%s603 + $0x2c] sm:$0xf]
    %v616 = vld [vmem:[%s603 + $0x30] sm:$0xf]
    %v617 = vld [vmem:[%s603 + $0x34] sm:$0xf]
    %v618 = vld [vmem:[%s603 + $0x38] sm:$0xf]
    %v619 = vld [vmem:[%s603 + $0x3c] sm:$0xf]
    %v620 = vpack.c.bf16 %v602, %v602
    %s621 = scalar_lea.vmem %s10, 1
    %v622 = vld [vmem:[%s621] sm:$0x1]
    %v624 = vperm.slane %v622, 0
    %v642 = vunpack.c.l.b16 %v604
    %v643 = vunpack.c.l.b16 %v605
    %v644 = vunpack.c.l.b16 %v606
    %v645 = vunpack.c.l.b16 %v607
    %v646 = vunpack.c.l.b16 %v608
    %v647 = vunpack.c.l.b16 %v609
    %v648 = vunpack.c.l.b16 %v610
    %v649 = vunpack.c.l.b16 %v611
    %v650 = vunpack.c.l.b16 %v612
    %v651 = vunpack.c.l.b16 %v613
    %v652 = vunpack.c.l.b16 %v614
    %v653 = vunpack.c.l.b16 %v615
    %v654 = vunpack.c.l.b16 %v616
    %v655 = vunpack.c.l.b16 %v617
    %v656 = vunpack.c.l.b16 %v618
    %v657 = vunpack.c.l.b16 %v619
    %v658 = vpack.c.b16 %v643, %v642
    %v659 = vpack.c.b16 %v645, %v644
    %v660 = vpack.c.b16 %v647, %v646
    %v661 = vpack.c.b16 %v649, %v648
    %v662 = vpack.c.b16 %v651, %v650
    %v663 = vpack.c.b16 %v653, %v652
    %v664 = vpack.c.b16 %v655, %v654
    %v665 = vpack.c.b16 %v657, %v656
    %674 = vmatpush.bf16.msra.mxu0 %v665
    %675 = vmatpush.bf16.msra.mxu0 %v664
    %676 = vmatpush.bf16.msra.mxu0 %v663
    %677 = vmatpush.bf16.msra.mxu0 %v662
    %678 = vmatpush.bf16.msra.mxu0 %v661
    %679 = vmatpush.bf16.msra.mxu0 %v660
    %680 = vmatpush.bf16.msra.mxu0 %v659
    %681 = vmatpush.bf16.msra.mxu0 %v658
    %682 = vmatmul.bf16.gmra.mxu0 %v620
    %v683 = vpop.f32.mrf.mxu0
    %v684 = vadd.f32 %v624, %v683
    %v685 = vpop.f32.mrf.mxu0
    %686 = vdwg.mxu0
    %s687 = scalar_lea.vmem %s11, 1
    %v688 = vld [vmem:[%s687] sm:$0x1]
    %s689 = scalar_lea.vmem %s12, 1
    %v690 = vld [vmem:[%s689] sm:$0x1]
    %691 = vadd.xlane.f32.xlu0 %v684
    %v692 = vpop.xlane.xlu0 %691
    %v693 = vmul.f32 %v684, %v684
    %694 = vadd.xlane.f32.xlu0 %v693
    %v695 = vpop.xlane.xlu0 %694
    %v696 = vmul.f32 %v692, 0.03125
    %v697 = vmul.f32 %v695, 0.03125
    %v698 = vmul.f32 %v696, %v696
    %v699 = vsub.f32 %v697, %v698
    %v700 = vsub.f32 %v684, %v696
    %v701 = vadd.f32 %v699, 1e-05
    %v702 = vrsqrt.pop %v701
    %v703 = vmul.f32 %v702, %v701
    %v704 = vmul.f32 %v703, %v702
    %v705 = vmul.f32 0.5, %v704
    %v706 = vsub.f32 1.5, %v705
    %v707 = vmul.f32 %v702, %v706
    %vm708 = vweird.f32 %v701
    %vm709 = vweird.f32 %v702
    %vm710 = vmor %vm708, %vm709
    %v711 = vsel %vm710, %v702, %v707
    %v712 = vmul.f32 %v700, %v711
    %v714 = vperm.slane %v688, 0
    %v716 = vmul.f32 %v712, %v714
    %v718 = vperm.slane %v690, 0
    %v720 = vadd.f32 %v716, %v718
    %v721 = vadd.f32 %v720, %v483
    %v722 = vmax.f32 %v721, 0.0
    %v723 = vld [vmem:[#allocation7] sm:$0xf]
    %v724 = vld [vmem:[#allocation7 + $0x4] sm:$0xf]
    %v725 = vld [vmem:[#allocation7 + $0x8] sm:$0xf]
    %v726 = vld [vmem:[#allocation7 + $0xc] sm:$0xf]
    %v727 = vld [vmem:[#allocation7 + $0x10] sm:$0xf]
    %v728 = vld [vmem:[#allocation7 + $0x14] sm:$0xf]
    %v729 = vld [vmem:[#allocation7 + $0x18] sm:$0xf]
    %v730 = vld [vmem:[#allocation7 + $0x1c] sm:$0xf]
    %v731 = vld [vmem:[#allocation7 + $0x20] sm:$0xf]
    %v732 = vld [vmem:[#allocation7 + $0x24] sm:$0xf]
    %v733 = vld [vmem:[#allocation7 + $0x28] sm:$0xf]
    %v734 = vld [vmem:[#allocation7 + $0x2c] sm:$0xf]
    %v735 = vld [vmem:[#allocation7 + $0x30] sm:$0xf]
    %v736 = vld [vmem:[#allocation7 + $0x34] sm:$0xf]
    %v737 = vld [vmem:[#allocation7 + $0x38] sm:$0xf]
    %v738 = vld [vmem:[#allocation7 + $0x3c] sm:$0xf]
    %v739 = vpack.c.bf16 %v722, %v722
    %v740 = vld [vmem:[%s14] sm:$0x1]
    %v742 = vperm.slane %v740, 0
    %v760 = vunpack.c.l.b16 %v723
    %v761 = vunpack.c.l.b16 %v724
    %v762 = vunpack.c.l.b16 %v725
    %v763 = vunpack.c.l.b16 %v726
    %v764 = vunpack.c.l.b16 %v727
    %v765 = vunpack.c.l.b16 %v728
    %v766 = vunpack.c.l.b16 %v729
    %v767 = vunpack.c.l.b16 %v730
    %v768 = vunpack.c.l.b16 %v731
    %v769 = vunpack.c.l.b16 %v732
    %v770 = vunpack.c.l.b16 %v733
    %v771 = vunpack.c.l.b16 %v734
    %v772 = vunpack.c.l.b16 %v735
    %v773 = vunpack.c.l.b16 %v736
    %v774 = vunpack.c.l.b16 %v737
    %v775 = vunpack.c.l.b16 %v738
    %v776 = vpack.c.b16 %v761, %v760
    %v777 = vpack.c.b16 %v763, %v762
    %v778 = vpack.c.b16 %v765, %v764
    %v779 = vpack.c.b16 %v767, %v766
    %v780 = vpack.c.b16 %v769, %v768
    %v781 = vpack.c.b16 %v771, %v770
    %v782 = vpack.c.b16 %v773, %v772
    %v783 = vpack.c.b16 %v775, %v774
    %792 = vmatpush.bf16.msra.mxu0 %v783
    %793 = vmatpush.bf16.msra.mxu0 %v782
    %794 = vmatpush.bf16.msra.mxu0 %v781
    %795 = vmatpush.bf16.msra.mxu0 %v780
    %796 = vmatpush.bf16.msra.mxu0 %v779
    %797 = vmatpush.bf16.msra.mxu0 %v778
    %798 = vmatpush.bf16.msra.mxu0 %v777
    %799 = vmatpush.bf16.msra.mxu0 %v776
    %800 = vmatmul.bf16.gmra.mxu0 %v739
    %v801 = vpop.f32.mrf.mxu0
    %v802 = vadd.f32 %v742, %v801
    %v803 = vpop.f32.mrf.mxu0
    %804 = vdwg.mxu0
    %v805 = vmax.f32 %v802, 0.0
    %v806 = vld [vmem:[#allocation9] sm:$0xf]
    %v807 = vld [vmem:[#allocation9 + $0x4] sm:$0xf]
    %v808 = vld [vmem:[#allocation9 + $0x8] sm:$0xf]
    %v809 = vld [vmem:[#allocation9 + $0xc] sm:$0xf]
    %v810 = vld [vmem:[#allocation9 + $0x10] sm:$0xf]
    %v811 = vld [vmem:[#allocation9 + $0x14] sm:$0xf]
    %v812 = vld [vmem:[#allocation9 + $0x18] sm:$0xf]
    %v813 = vld [vmem:[#allocation9 + $0x1c] sm:$0xf]
    %v814 = vld [vmem:[#allocation9 + $0x20] sm:$0xf]
    %v815 = vld [vmem:[#allocation9 + $0x24] sm:$0xf]
    %v816 = vld [vmem:[#allocation9 + $0x28] sm:$0xf]
    %v817 = vld [vmem:[#allocation9 + $0x2c] sm:$0xf]
    %v818 = vld [vmem:[#allocation9 + $0x30] sm:$0xf]
    %v819 = vld [vmem:[#allocation9 + $0x34] sm:$0xf]
    %v820 = vld [vmem:[#allocation9 + $0x38] sm:$0xf]
    %v821 = vld [vmem:[#allocation9 + $0x3c] sm:$0xf]
    %v822 = vpack.c.bf16 %v805, %v805
    %v823 = vld [vmem:[%s16] sm:$0x1]
    %v825 = vperm.slane %v823, 0
    %v843 = vunpack.c.l.b16 %v806
    %v844 = vunpack.c.l.b16 %v807
    %v845 = vunpack.c.l.b16 %v808
    %v846 = vunpack.c.l.b16 %v809
    %v847 = vunpack.c.l.b16 %v810
    %v848 = vunpack.c.l.b16 %v811
    %v849 = vunpack.c.l.b16 %v812
    %v850 = vunpack.c.l.b16 %v813
    %v851 = vunpack.c.l.b16 %v814
    %v852 = vunpack.c.l.b16 %v815
    %v853 = vunpack.c.l.b16 %v816
    %v854 = vunpack.c.l.b16 %v817
    %v855 = vunpack.c.l.b16 %v818
    %v856 = vunpack.c.l.b16 %v819
    %v857 = vunpack.c.l.b16 %v820
    %v858 = vunpack.c.l.b16 %v821
    %v859 = vpack.c.b16 %v844, %v843
    %v860 = vpack.c.b16 %v846, %v845
    %v861 = vpack.c.b16 %v848, %v847
    %v862 = vpack.c.b16 %v850, %v849
    %v863 = vpack.c.b16 %v852, %v851
    %v864 = vpack.c.b16 %v854, %v853
    %v865 = vpack.c.b16 %v856, %v855
    %v866 = vpack.c.b16 %v858, %v857
    %875 = vmatpush.bf16.msra.mxu0 %v866
    %876 = vmatpush.bf16.msra.mxu0 %v865
    %877 = vmatpush.bf16.msra.mxu0 %v864
    %878 = vmatpush.bf16.msra.mxu0 %v863
    %879 = vmatpush.bf16.msra.mxu0 %v862
    %880 = vmatpush.bf16.msra.mxu0 %v861
    %881 = vmatpush.bf16.msra.mxu0 %v860
    %882 = vmatpush.bf16.msra.mxu0 %v859
    %883 = vmatmul.bf16.gmra.mxu0 %v822
    %v884 = vpop.f32.mrf.mxu0
    %v885 = vadd.f32 %v825, %v884
    %v886 = vpop.f32.mrf.mxu0
    %887 = vdwg.mxu0
    %v888 = vsel %vm136, 1, 0
    %vm889 = vcmp.eq.s32.totalorder %v888, 1
    %v890 = vsel %vm889, %v885, -1e+30
    %891 = vmax.xlane.f32.xlu0 %v890
    %v892 = vpop.xlane.xlu0 %891
    %v893 = vsub.f32 %v890, %v892
    %v894 = vmul.f32 %v893, 1.442695
    %v895 = vpow.pop %v894
    %896 = vadd.xlane.f32.xlu0 %v895
    %v897 = vpop.xlane.xlu0 %896
    %v898 = vrcp.pop %v897
    %v899 = vmul.f32 %v897, %v898
    %v900 = vsub.f32 1.0, %v899
    %v901 = vmul.f32 %v898, %v900
    %v902 = vadd.f32 %v898, %v901
    %vm903 = vweird.f32 %v897
    %vm904 = vweird.f32 %v898
    %vm905 = vmor %vm903, %vm904
    %v906 = vsel %vm905, %v898, %v902
    %v907 = vand.u32 2147483647, %v897
    %vm908 = vcmp.eq.f32.partialorder %v907, 8.507059e+37
    %v909 = vand.u32 %v897, 2147483648
    %v910 = vor.u32 1.1754944e-38, %v909
    %v911 = vsel %vm908, %v910, %v906
    %v912 = vmul.f32 %v895, %v911
    %913 = vst [vmem:[%s17] sm:$0xff] %v912
    // Predicated region
    $region90: #{linear_resnet_forward.1} parent=1 // pred_check
      _
    $region91: #{linear_resnet_forward.1} parent=1 // pred_check_branch
      %915 = sbr.rel (0) target = $region93
    $region92: #{linear_resnet_forward.1} parent=1 // pred_region
      _
    $region93: #{linear_resnet_forward.1} parent=1 // pred_fallthru
      _
    // Predicated region
    $region94: #{linear_resnet_forward.1} parent=1 // pred_check
      _
    $region95: #{linear_resnet_forward.1} parent=1 // pred_check_branch
      %917 = sbr.rel (0) target = $region97
    $region96: #{linear_resnet_forward.1} parent=1 // pred_region
      _
    $region97: #{linear_resnet_forward.1} parent=1 // pred_fallthru
      _
    %918 = vsyncpa [#allocation3], 1
    %919 = vsyncpa [#allocation5], 1
    %920 = vsyncpa [#allocation8], 1

</llo_original>
